<compile_context>
chip_gen: v6e
topology: v6e:2x2x1
jax: 0.10.0
libtpu: 0.0.40
codegen_flags: <defaults>
</compile_context>

<pallas_src>
import functools
import math

import jax
import jax.numpy as jnp
from jax.experimental import pallas as pl
from jax.experimental.pallas import tpu as pltpu

C1 = 128          # conv1 out channels, padded 64 -> 128 (lane-dense); zero-padded weights
C2 = 128          # conv2 out channels
HENC = 256        # encoder hidden width (nn.Linear(dim_embedding, 256))
BN_EPS = 1e-5

# ---- packed parameter slab row layout (each row is one 128-lane-aligned f32 vector) ----
(_W1R0, _W1R1, _W1R2,
 _B1, _B2, _B3,
 _G1, _BE1, _G2, _BE2, _G3, _BE3,
 _PHASE, _OFFS,
 _EB1, _EB2) = range(16)
_SLAB_ROWS = 16

# ---- folded-BN output rows (emitted by the stats kernel, consumed by the forward kernel) ----
(_SC1, _SH1, _SC2, _SH2, _SC3, _SH3) = range(6)
_FOLD_ROWS = 8   # padded to 8 sublanes


def _posenc_consts(D):
    _2i = jnp.arange(0, D, 2, dtype=jnp.float32)
    phase = 100.0 / (1000.0 ** (_2i / D))                    # (D/2,)
    phase_full = jnp.repeat(phase, 2)                        # phase[k] at channels 2k, 2k+1
    # sin(x + pi/2) == cos(x): one transcendental per element instead of sin+cos+mask
    offset = jnp.where(jnp.arange(D) % 2 == 0, 0.0, jnp.pi / 2.0).astype(jnp.float32)
    return phase_full, offset


# ----------------------------- stats kernel ----------------------------------
# Sequential streaming pass: phase 0 -> layer-1 pre-activation stats,
# phase 1 -> layer-2 stats, phase 2 -> layer-3 stats. Emits folded scale/shift.

def _stats_kernel(xr_ref, slab_ref, w2_ref, w3_ref, fold_ref,
                  s1_ref, s2_ref, s3_ref, *, count, D):
    p = pl.program_id(0)          # BN layer phase 0..2
    i = pl.program_id(1)          # batch tile
    last = pl.num_programs(1) - 1
    inv_count = 1.0 / float(count)

    def vec(row, width):          # (1, width) f32 parameter vector, read per use
        return slab_ref[row:row + 1, :width]

    @pl.when((p == 0) & (i == 0))
    def _init():
        s1_ref[...] = jnp.zeros_like(s1_ref)
        s2_ref[...] = jnp.zeros_like(s2_ref)
        s3_ref[...] = jnp.zeros_like(s3_ref)
        fold_ref[...] = jnp.zeros_like(fold_ref)

    x = xr_ref[...]               # (R, 4): col 0 = t (unused here), cols 1..3 = events

    # conv1 (3 -> C1) on the VPU: three broadcast FMAs (exact f32, no K padding)
    pre1 = (x[:, 1:2] * vec(_W1R0, C1)
            + x[:, 2:3] * vec(_W1R1, C1)
            + x[:, 3:4] * vec(_W1R2, C1)
            + vec(_B1, C1))                                   # (R, C1) f32

    def accum(s_ref, pre):
        s_ref[0:1, :] += jnp.sum(pre, axis=0, keepdims=True)
        s_ref[1:2, :] += jnp.sum(pre * pre, axis=0, keepdims=True)

    def fold(s_ref, g, b, sc_row, sh_row, width):
        mean = s_ref[0:1, :] * inv_count
        var = jnp.maximum(s_ref[1:2, :] * inv_count - mean * mean, 0.0)
        scale = g * jax.lax.rsqrt(var + BN_EPS)
        fold_ref[sc_row:sc_row + 1, :width] = scale
        fold_ref[sh_row:sh_row + 1, :width] = b - mean * scale

    @pl.when(p == 0)
    def _phase0():
        accum(s1_ref, pre1)

        @pl.when(i == last)
        def _():
            fold(s1_ref, vec(_G1, C1), vec(_BE1, C1), _SC1, _SH1, C1)

    @pl.when(p >= 1)
    def _phase12():
        h1 = jnp.maximum(pre1 * fold_ref[_SC1:_SC1 + 1, :C1]
                         + fold_ref[_SH1:_SH1 + 1, :C1], 0.0)
        pre2 = jnp.dot(h1.astype(jnp.bfloat16), w2_ref[...],
                       preferred_element_type=jnp.float32) + vec(_B2, C2)

        @pl.when(p == 1)
        def _stats2():
            accum(s2_ref, pre2)

            @pl.when(i == last)
            def _():
                fold(s2_ref, vec(_G2, C2), vec(_BE2, C2), _SC2, _SH2, C2)

        @pl.when(p == 2)
        def _stats3():
            h2 = jnp.maximum(pre2 * fold_ref[_SC2:_SC2 + 1, :C2]
                             + fold_ref[_SH2:_SH2 + 1, :C2], 0.0)
            pre3 = jnp.dot(h2.astype(jnp.bfloat16), w3_ref[...],
                           preferred_element_type=jnp.float32) + vec(_B3, D)
            accum(s3_ref, pre3)

            @pl.when(i == last)
            def _():
                fold(s3_ref, vec(_G3, D), vec(_BE3, D), _SC3, _SH3, D)


# ----------------------------- forward kernel ---------------------------------
# Embarrassingly parallel over batch tiles once BN stats are frozen.

def _fwd_kernel(xr_ref, slab_ref, fold_ref, w2_ref, w3_ref, ew1_ref, ew2_ref,
                out_ref, *, n_events, btile, D, V):
    def vec(row, width):
        return slab_ref[row:row + 1, :width]

    def fvec(row, width):
        return fold_ref[row:row + 1, :width]

    x = xr_ref[...]                                           # (R, 4)
    t = x[:, 0:1]                                             # (R, 1) timestamps

    pre1 = (x[:, 1:2] * vec(_W1R0, C1)
            + x[:, 2:3] * vec(_W1R1, C1)
            + x[:, 3:4] * vec(_W1R2, C1)
            + vec(_B1, C1))
    h1 = jnp.maximum(pre1 * fvec(_SC1, C1) + fvec(_SH1, C1), 0.0)

    pre2 = jnp.dot(h1.astype(jnp.bfloat16), w2_ref[...],
                   preferred_element_type=jnp.float32) + vec(_B2, C2)
    h2 = jnp.maximum(pre2 * fvec(_SC2, C2) + fvec(_SH2, C2), 0.0)

    pre3 = jnp.dot(h2.astype(jnp.bfloat16), w3_ref[...],
                   preferred_element_type=jnp.float32) + vec(_B3, D)
    h3 = jnp.maximum(pre3 * fvec(_SC3, D) + fvec(_SH3, D), 0.0)

    # positional encoding: single sin, offset pi/2 on odd channels == cos
    enc = jnp.sin(t * vec(_PHASE, D) + vec(_OFFS, D))         # (R, D)
    h = h3 + enc

    m = jnp.max(h.reshape(btile, n_events, D), axis=1)        # (btile, D) max over events
    z = jnp.maximum(m, 0.0)
    z = jnp.maximum(jnp.dot(z.astype(jnp.bfloat16), ew1_ref[...],
                            preferred_element_type=jnp.float32) + vec(_EB1, HENC), 0.0)
    out_ref[...] = jnp.dot(z.astype(jnp.bfloat16), ew2_ref[...],
                           preferred_element_type=jnp.float32) + vec(_EB2, V)


# ----------------------------- param packing ---------------------------------

def pack_params(p, D, V):
    """Pack all small per-channel params into one (16, W) f32 slab + bf16 weight mats."""
    W = max(256, D, V)

    def row(v):
        v = jnp.asarray(v, jnp.float32).reshape(1, -1)
        return jnp.pad(v, ((0, 0), (0, W - v.shape[1])))

    phase_full, offset = _posenc_consts(D)
    w1 = jnp.pad(p["w1"], ((0, 0), (0, C1 - p["w1"].shape[1])))             # (3, C1)
    b1 = jnp.pad(p["b1"], (0, C1 - p["b1"].shape[0]))
    g1 = jnp.pad(p["g1"], (0, C1 - p["g1"].shape[0]), constant_values=1.0)
    be1 = jnp.pad(p["be1"], (0, C1 - p["be1"].shape[0]))

    rows = [None] * _SLAB_ROWS
    rows[_W1R0], rows[_W1R1], rows[_W1R2] = row(w1[0]), row(w1[1]), row(w1[2])
    rows[_B1], rows[_B2], rows[_B3] = row(b1), row(p["b2"]), row(p["b3"])
    rows[_G1], rows[_BE1] = row(g1), row(be1)
    rows[_G2], rows[_BE2] = row(p["g2"]), row(p["be2"])
    rows[_G3], rows[_BE3] = row(p["g3"]), row(p["be3"])
    rows[_PHASE], rows[_OFFS] = row(phase_full), row(offset)
    rows[_EB1], rows[_EB2] = row(p["eb1"]), row(p["eb2"])
    slab = jnp.concatenate(rows, axis=0)                                     # (16, W)

    w2p = jnp.pad(p["w2"], ((0, C1 - p["w2"].shape[0]), (0, 0))).astype(jnp.bfloat16)  # (C1, C2)
    w3p = p["w3"].astype(jnp.bfloat16)                                       # (C2, D)
    ew1 = p["ew1"].astype(jnp.bfloat16)                                      # (D, HENC)
    ew2 = p["ew2"].astype(jnp.bfloat16)                                      # (HENC, V)
    return slab, w2p, w3p, ew1, ew2


def _vmem_limit_bytes(R, D, V, weight_bytes):
    act = R * max(C1, C2, D, HENC, V) * 4          # one f32 activation tile
    est = 10 * act + 3 * weight_bytes + (4 << 20)
    # clamp to 56 MiB so the same sizing stays safe on v7x (64 MiB physical VMEM)
    return int(min(max(est, 32 << 20), 56 << 20))


# ----------------------------- wrapper ---------------------------------------

def discrete_event_vae_forward(x, params, dim_embedding, vocab_size, *, batch_tile=128):
    """x: (B, 4, N) f32 (channel 0 = timestamps, 1..3 = events) -> logits (B, vocab_size)."""
    B, C, N = x.shape
    assert C == 4
    D, V = dim_embedding, vocab_size
    assert D % 128 == 0 and V % 128 == 0, "demo kernel assumes 128-lane-aligned D and vocab"

    # pick the largest tile <= batch_tile that divides B and keeps rows a multiple of 8
    bt = B
    cand = min(batch_tile, B)
    while cand >= 1:
        if B % cand == 0 and (cand * N) % 8 == 0:
            bt = cand
            break
        cand -= 1
    n_tiles = B // bt
    R = bt * N                      # rows per tile
    R_all = B * N
    count = B * N                   # BatchNorm population (full batch x events)
    WS = max(C1, C2, D)             # folded-param lane width

    slab, w2p, w3p, ew1, ew2 = pack_params(params, D, V)
    weight_bytes = slab.size * 4 + 2 * (w2p.size + w3p.size + ew1.size + ew2.size)

    # NCW -> (rows = B*N, 4): single cheap transpose in XLA; kernels work lane-dense 2-D.
    xr = jnp.transpose(x, (0, 2, 1)).reshape(B * N, 4)

    # ---------------- pass 1: sequential BN-statistics kernel -> folded scale/shift ----
    stats_kernel = functools.partial(_stats_kernel, count=count, D=D)
    stats_flops = R_all * (3 * (2 * 3 * C1) + 2 * (2 * C1 * C2) + 1 * (2 * C2 * D))
    stats_bytes = 3 * xr.size * 4 + weight_bytes + _FOLD_ROWS * WS * 4

    fold = pl.pallas_call(
        stats_kernel,
        out_shape=jax.ShapeDtypeStruct((_FOLD_ROWS, WS), jnp.float32),
        grid_spec=pltpu.PrefetchScalarGridSpec(
            num_scalar_prefetch=0,
            grid=(3, n_tiles),
            in_specs=[
                pl.BlockSpec((R, 4), lambda p, i: (i, 0)),             # event rows, per tile
                pl.BlockSpec(slab.shape, lambda p, i: (0, 0)),         # packed small params
                pl.BlockSpec(w2p.shape, lambda p, i: (0, 0)),
                pl.BlockSpec(w3p.shape, lambda p, i: (0, 0)),
            ],
            out_specs=pl.BlockSpec((_FOLD_ROWS, WS), lambda p, i: (0, 0)),
            scratch_shapes=[
                pltpu.VMEM((2, C1), jnp.float32),    # layer-1 [sum; sum_sq]
                pltpu.VMEM((2, C2), jnp.float32),    # layer-2 [sum; sum_sq]
                pltpu.VMEM((2, D), jnp.float32),     # layer-3 [sum; sum_sq]
            ],
        ),
        compiler_params=pltpu.CompilerParams(
            # batch statistics couple tiles and phases -> sequential
            dimension_semantics=("arbitrary", "arbitrary"),
            vmem_limit_bytes=_vmem_limit_bytes(R, D, V, weight_bytes),
        ),
        cost_estimate=pl.CostEstimate(flops=int(stats_flops),
                                      transcendentals=int(3 * WS),
                                      bytes_accessed=int(stats_bytes)),
    )(xr, slab, w2p, w3p)

    # ---------------- pass 2: forward kernel, parallel over batch tiles ----------------
    fwd_kernel = functools.partial(_fwd_kernel, n_events=N, btile=bt, D=D, V=V)
    fwd_flops = (R_all * (2 * 3 * C1 + 2 * C1 * C2 + 2 * C2 * D)
                 + B * 2 * (D * HENC + HENC * V))
    fwd_bytes = xr.size * 4 + weight_bytes + _FOLD_ROWS * WS * 4 + B * V * 4

    logits = pl.pallas_call(
        fwd_kernel,
        out_shape=jax.ShapeDtypeStruct((B, V), jnp.float32),
        grid_spec=pltpu.PrefetchScalarGridSpec(
            num_scalar_prefetch=0,
            grid=(n_tiles,),
            in_specs=[
                pl.BlockSpec((R, 4), lambda i: (i, 0)),
                pl.BlockSpec(slab.shape, lambda i: (0, 0)),
                pl.BlockSpec((_FOLD_ROWS, WS), lambda i: (0, 0)),      # folded BN params
                pl.BlockSpec(w2p.shape, lambda i: (0, 0)),
                pl.BlockSpec(w3p.shape, lambda i: (0, 0)),
                pl.BlockSpec(ew1.shape, lambda i: (0, 0)),
                pl.BlockSpec(ew2.shape, lambda i: (0, 0)),
            ],
            out_specs=pl.BlockSpec((bt, V), lambda i: (i, 0)),
        ),
        compiler_params=pltpu.CompilerParams(
            dimension_semantics=("parallel",),       # tiles are independent -> both TCs on v7x
            vmem_limit_bytes=_vmem_limit_bytes(R, D, V, weight_bytes),
        ),
        cost_estimate=pl.CostEstimate(flops=int(fwd_flops),
                                      transcendentals=int(R_all * D + 3 * WS),
                                      bytes_accessed=int(fwd_bytes)),
    )(xr, slab, fold, w2p, w3p, ew1, ew2)
    return logits


# ----------------------------- params ----------------------------------------

def init_params(key, dim_embedding, vocab_size):
    D, V = dim_embedding, vocab_size

    def u(k, shape, fan_in):
        b = 1.0 / math.sqrt(fan_in)
        return jax.random.uniform(k, shape, jnp.float32, -b, b)

    ks = jax.random.split(key, 10)
    return dict(
        w1=u(ks[0], (3, 64), 3), b1=u(ks[1], (64,), 3),
        g1=jnp.ones((64,), jnp.float32), be1=jnp.zeros((64,), jnp.float32),
        w2=u(ks[2], (64, 128), 64), b2=u(ks[3], (128,), 64),
        g2=jnp.ones((128,), jnp.float32), be2=jnp.zeros((128,), jnp.float32),
        w3=u(ks[4], (128, D), 128), b3=u(ks[5], (D,), 128),
        g3=jnp.ones((D,), jnp.float32), be3=jnp.zeros((D,), jnp.float32),
        ew1=u(ks[6], (D, 256), D), eb1=u(ks[7], (256,), D),
        ew2=u(ks[8], (256, V), 256), eb2=u(ks[9], (V,), 256),
    )


# ----------------------------- pure-JAX reference -----------------------------
# Mirrors the PyTorch module (training-mode BatchNorm), with the same bf16 casts
# at the MXU dots so the tolerance check is tight.

def reference_forward(x, params, dim_embedding, vocab_size):
    p = params
    D = dim_embedding
    t = x[:, 0, :]                                           # (B, N)
    ev = jnp.transpose(x[:, 1:4, :], (0, 2, 1))              # (B, N, 3)

    def bdot(a, w):
        return jnp.dot(a.astype(jnp.bfloat16), w.astype(jnp.bfloat16),
                       preferred_element_type=jnp.float32)

    def bn_relu(h, g, b):
        mean = jnp.mean(h, axis=(0, 1), keepdims=True)
        var = jnp.maximum(jnp.mean(h * h, axis=(0, 1), keepdims=True) - mean * mean, 0.0)
        scale = g * jax.lax.rsqrt(var + BN_EPS)
        return jnp.maximum(h * scale + (b - mean * scale), 0.0)

    h = ev @ p["w1"] + p["b1"]                               # first conv stays f32
    h = bn_relu(h, p["g1"], p["be1"])
    h = bn_relu(bdot(h, p["w2"]) + p["b2"], p["g2"], p["be2"])
    h = bn_relu(bdot(h, p["w3"]) + p["b3"], p["g3"], p["be3"])
    phase_full, offset = _posenc_consts(D)
    h = h + jnp.sin(t[..., None] * phase_full + offset)
    z = jnp.maximum(jnp.max(h, axis=1), 0.0)
    z = jnp.maximum(bdot(z, p["ew1"]) + p["eb1"], 0.0)
    return bdot(z, p["ew2"]) + p["eb2"]


# ----------------------------- main -------------------------------------------

if __name__ == "__main__":
    B, N = 32, 16                 # 32 tokens, 16 events per token
    DIM_EMBEDDING = 128
    VOCAB_SIZE = 256

    key = jax.random.PRNGKey(0)
    kx, kp = jax.random.split(key)
    # input: (B, 4, N): channel 0 = timestamps, channels 1..3 = event features
    x = jax.random.normal(kx, (B, 4, N), jnp.float32)
    params = init_params(kp, DIM_EMBEDDING, VOCAB_SIZE)

    # batch_tile=16 here exercises the multi-tile (2 tiles x 256 rows) path; the
    # default batch_tile=128 gives 2048-row tiles on larger batches.
    logits = discrete_event_vae_forward(x, params, DIM_EMBEDDING, VOCAB_SIZE, batch_tile=16)
    logits = jax.block_until_ready(logits)

    ref = jax.block_until_ready(reference_forward(x, params, DIM_EMBEDDING, VOCAB_SIZE))
    assert logits.shape == (B, VOCAB_SIZE)
    max_err = float(jnp.max(jnp.abs(logits - ref)))
    assert jnp.allclose(logits, ref, atol=1e-2, rtol=1e-2), f"max abs err {max_err}"

    print("KERNEL_OK")
</pallas_src>

<mosaic_0001>
module attributes {stable_mosaic.version = 11 : i64} {
  func.func @_stats_kernel(%arg0: i32, %arg1: i32, %arg2: memref<256x4xf32, #tpu.memory_space<vmem>>, %arg3: memref<16x256xf32, #tpu.memory_space<vmem>>, %arg4: memref<128x128xbf16, #tpu.memory_space<vmem>>, %arg5: memref<128x128xbf16, #tpu.memory_space<vmem>>, %arg6: memref<8x128xf32, #tpu.memory_space<vmem>>, %arg7: memref<2x128xf32, #tpu.memory_space<vmem>>, %arg8: memref<2x128xf32, #tpu.memory_space<vmem>>, %arg9: memref<2x128xf32, #tpu.memory_space<vmem>>) attributes {dimension_semantics = [#tpu.dimension_semantics<arbitrary>, #tpu.dimension_semantics<arbitrary>], iteration_bounds = array<i64: 3, 2>, scalar_prefetch = 0 : i64, scratch_operands = 3 : i64, tpu.core_type = #tpu.core_type<tc>, window_params = [{transform_indices = @transform_0, window_bounds = array<i64: 256, 4>}, {pipeline_mode = #tpu.pipeline_mode<synchronous>, transform_indices = @transform_1, window_bounds = array<i64: 16, 256>}, {pipeline_mode = #tpu.pipeline_mode<synchronous>, transform_indices = @transform_2, window_bounds = array<i64: 128, 128>}, {pipeline_mode = #tpu.pipeline_mode<synchronous>, transform_indices = @transform_3, window_bounds = array<i64: 128, 128>}, {pipeline_mode = #tpu.pipeline_mode<synchronous>, transform_indices = @transform_4, window_bounds = array<i64: 8, 128>}]} {
    %c0_i32 = arith.constant 0 : i32
    %0 = arith.cmpi eq, %arg0, %c0_i32 : i32
    %c0_i32_0 = arith.constant 0 : i32
    %1 = arith.cmpi eq, %arg1, %c0_i32_0 : i32
    %2 = arith.andi %0, %1 : i1
    %3 = arith.extui %2 : i1 to i32
    %c0_i32_1 = arith.constant 0 : i32
    %4 = arith.cmpi ne, %3, %c0_i32_1 : i32
    scf.if %4 {
      %cst = arith.constant 0.000000e+00 : f32
      %32 = vector.broadcast %cst : f32 to vector<2x128xf32>
      %c0_11 = arith.constant 0 : index
      %c0_12 = arith.constant 0 : index
      %33 = vector.load %arg7[%c0_11, %c0_12] : memref<2x128xf32, #tpu.memory_space<vmem>>, vector<2x128xf32>
      tpu.vector_store %arg7[%c0_11, %c0_12], %32 {strides = array<i32>} : memref<2x128xf32, #tpu.memory_space<vmem>>, vector<2x128xf32>,
      %cst_13 = arith.constant 0.000000e+00 : f32
      %34 = vector.broadcast %cst_13 : f32 to vector<2x128xf32>
      %c0_14 = arith.constant 0 : index
      %c0_15 = arith.constant 0 : index
      %35 = vector.load %arg8[%c0_14, %c0_15] : memref<2x128xf32, #tpu.memory_space<vmem>>, vector<2x128xf32>
      tpu.vector_store %arg8[%c0_14, %c0_15], %34 {strides = array<i32>} : memref<2x128xf32, #tpu.memory_space<vmem>>, vector<2x128xf32>,
      %cst_16 = arith.constant 0.000000e+00 : f32
      %36 = vector.broadcast %cst_16 : f32 to vector<2x128xf32>
      %c0_17 = arith.constant 0 : index
      %c0_18 = arith.constant 0 : index
      %37 = vector.load %arg9[%c0_17, %c0_18] : memref<2x128xf32, #tpu.memory_space<vmem>>, vector<2x128xf32>
      tpu.vector_store %arg9[%c0_17, %c0_18], %36 {strides = array<i32>} : memref<2x128xf32, #tpu.memory_space<vmem>>, vector<2x128xf32>,
      %cst_19 = arith.constant 0.000000e+00 : f32
      %38 = vector.broadcast %cst_19 : f32 to vector<8x128xf32>
      %c0_20 = arith.constant 0 : index
      %c0_21 = arith.constant 0 : index
      %39 = vector.load %arg6[%c0_20, %c0_21] : memref<8x128xf32, #tpu.memory_space<vmem>>, vector<8x128xf32>
      tpu.vector_store %arg6[%c0_20, %c0_21], %38 {strides = array<i32>} : memref<8x128xf32, #tpu.memory_space<vmem>>, vector<8x128xf32>,
    } else {
    }
    %c0 = arith.constant 0 : index
    %c0_2 = arith.constant 0 : index
    %5 = vector.load %arg2[%c0, %c0_2] : memref<256x4xf32, #tpu.memory_space<vmem>>, vector<256x4xf32>
    %6 = vector.extract_strided_slice %5 {offsets = [0, 1], sizes = [256, 1], strides = [1, 1]} : vector<256x4xf32> to vector<256x1xf32>
    %c0_3 = arith.constant 0 : index
    %c0_4 = arith.constant 0 : index
    %7 = vector.load %arg3[%c0_3, %c0_4] : memref<16x256xf32, #tpu.memory_space<vmem>>, vector<1x128xf32>
    %8 = vector.broadcast %6 : vector<256x1xf32> to vector<256x128xf32>
    %9 = vector.broadcast %7 : vector<1x128xf32> to vector<256x128xf32>
    %10 = arith.mulf %8, %9 : vector<256x128xf32>
    %11 = vector.extract_strided_slice %5 {offsets = [0, 2], sizes = [256, 1], strides = [1, 1]} : vector<256x4xf32> to vector<256x1xf32>
    %c1 = arith.constant 1 : index
    %c0_5 = arith.constant 0 : index
    %12 = vector.load %arg3[%c1, %c0_5] : memref<16x256xf32, #tpu.memory_space<vmem>>, vector<1x128xf32>
    %13 = vector.broadcast %11 : vector<256x1xf32> to vector<256x128xf32>
    %14 = vector.broadcast %12 : vector<1x128xf32> to vector<256x128xf32>
    %15 = arith.mulf %13, %14 : vector<256x128xf32>
    %16 = arith.addf %10, %15 : vector<256x128xf32>
    %17 = vector.extract_strided_slice %5 {offsets = [0, 3], sizes = [256, 1], strides = [1, 1]} : vector<256x4xf32> to vector<256x1xf32>
    %c2 = arith.constant 2 : index
    %c0_6 = arith.constant 0 : index
    %18 = vector.load %arg3[%c2, %c0_6] : memref<16x256xf32, #tpu.memory_space<vmem>>, vector<1x128xf32>
    %19 = vector.broadcast %17 : vector<256x1xf32> to vector<256x128xf32>
    %20 = vector.broadcast %18 : vector<1x128xf32> to vector<256x128xf32>
    %21 = arith.mulf %19, %20 : vector<256x128xf32>
    %22 = arith.addf %16, %21 : vector<256x128xf32>
    %c3 = arith.constant 3 : index
    %c0_7 = arith.constant 0 : index
    %23 = vector.load %arg3[%c3, %c0_7] : memref<16x256xf32, #tpu.memory_space<vmem>>, vector<1x128xf32>
    %24 = vector.broadcast %23 : vector<1x128xf32> to vector<256x128xf32>
    %25 = arith.addf %22, %24 : vector<256x128xf32>
    %c0_i32_8 = arith.constant 0 : i32
    %26 = arith.cmpi eq, %arg0, %c0_i32_8 : i32
    %27 = arith.extui %26 : i1 to i32
    %c0_i32_9 = arith.constant 0 : i32
    %28 = arith.cmpi ne, %27, %c0_i32_9 : i32
    scf.if %28 {
      %c0_11 = arith.constant 0 : index
      %c0_12 = arith.constant 0 : index
      %32 = vector.load %arg7[%c0_11, %c0_12] : memref<2x128xf32, #tpu.memory_space<vmem>>, vector<1x128xf32>
      %cst = arith.constant dense<0.000000e+00> : vector<128xf32>
      %33 = vector.multi_reduction <add>, %25, %cst [0] : vector<256x128xf32> to vector<128xf32>
      %34 = vector.shape_cast %33 : vector<128xf32> to vector<1x128xf32>
      %35 = arith.addf %32, %34 : vector<1x128xf32>
      %c0_13 = arith.constant 0 : index
      %c0_14 = arith.constant 0 : index
      %36 = vector.load %arg7[%c0_13, %c0_14] : memref<2x128xf32, #tpu.memory_space<vmem>>, vector<1x128xf32>
      tpu.vector_store %arg7[%c0_13, %c0_14], %35 {strides = array<i32>} : memref<2x128xf32, #tpu.memory_space<vmem>>, vector<1x128xf32>,
      %c1_15 = arith.constant 1 : index
      %c0_16 = arith.constant 0 : index
      %37 = vector.load %arg7[%c1_15, %c0_16] : memref<2x128xf32, #tpu.memory_space<vmem>>, vector<1x128xf32>
      %38 = arith.mulf %25, %25 : vector<256x128xf32>
      %cst_17 = arith.constant dense<0.000000e+00> : vector<128xf32>
      %39 = vector.multi_reduction <add>, %38, %cst_17 [0] : vector<256x128xf32> to vector<128xf32>
      %40 = vector.shape_cast %39 : vector<128xf32> to vector<1x128xf32>
      %41 = arith.addf %37, %40 : vector<1x128xf32>
      %c1_18 = arith.constant 1 : index
      %c0_19 = arith.constant 0 : index
      %42 = vector.load %arg7[%c1_18, %c0_19] : memref<2x128xf32, #tpu.memory_space<vmem>>, vector<1x128xf32>
      tpu.vector_store %arg7[%c1_18, %c0_19], %41 {strides = array<i32>} : memref<2x128xf32, #tpu.memory_space<vmem>>, vector<1x128xf32>,
      %c1_i32_20 = arith.constant 1 : i32
      %43 = arith.cmpi eq, %arg1, %c1_i32_20 : i32
      %44 = arith.extui %43 : i1 to i32
      %c0_i32_21 = arith.constant 0 : i32
      %45 = arith.cmpi ne, %44, %c0_i32_21 : i32
      scf.if %45 {
        %c6 = arith.constant 6 : index
        %c0_22 = arith.constant 0 : index
        %46 = vector.load %arg3[%c6, %c0_22] : memref<16x256xf32, #tpu.memory_space<vmem>>, vector<1x128xf32>
        %c7 = arith.constant 7 : index
        %c0_23 = arith.constant 0 : index
        %47 = vector.load %arg3[%c7, %c0_23] : memref<16x256xf32, #tpu.memory_space<vmem>>, vector<1x128xf32>
        %c0_24 = arith.constant 0 : index
        %c0_25 = arith.constant 0 : index
        %48 = vector.load %arg7[%c0_24, %c0_25] : memref<2x128xf32, #tpu.memory_space<vmem>>, vector<1x128xf32>
        %cst_26 = arith.constant 0.001953125 : f32
        %49 = vector.broadcast %cst_26 : f32 to vector<1x128xf32>
        %50 = arith.mulf %48, %49 : vector<1x128xf32>
        %c1_27 = arith.constant 1 : index
        %c0_28 = arith.constant 0 : index
        %51 = vector.load %arg7[%c1_27, %c0_28] : memref<2x128xf32, #tpu.memory_space<vmem>>, vector<1x128xf32>
        %cst_29 = arith.constant 0.001953125 : f32
        %52 = vector.broadcast %cst_29 : f32 to vector<1x128xf32>
        %53 = arith.mulf %51, %52 : vector<1x128xf32>
        %54 = arith.mulf %50, %50 : vector<1x128xf32>
        %55 = arith.subf %53, %54 : vector<1x128xf32>
        %cst_30 = arith.constant 0.000000e+00 : f32
        %56 = vector.broadcast %cst_30 : f32 to vector<1x128xf32>
        %57 = arith.maximumf %55, %56 : vector<1x128xf32>
        %cst_31 = arith.constant 9.99999974E-6 : f32
        %58 = vector.broadcast %cst_31 : f32 to vector<1x128xf32>
        %59 = arith.addf %57, %58 : vector<1x128xf32>
        %60 = math.rsqrt %59 : vector<1x128xf32>
        %61 = arith.mulf %46, %60 : vector<1x128xf32>
        %c0_32 = arith.constant 0 : index
        %c0_33 = arith.constant 0 : index
        %62 = vector.load %arg6[%c0_32, %c0_33] : memref<8x128xf32, #tpu.memory_space<vmem>>, vector<1x128xf32>
        tpu.vector_store %arg6[%c0_32, %c0_33], %61 {strides = array<i32>} : memref<8x128xf32, #tpu.memory_space<vmem>>, vector<1x128xf32>,
        %63 = arith.mulf %50, %61 : vector<1x128xf32>
        %64 = arith.subf %47, %63 : vector<1x128xf32>
        %c1_34 = arith.constant 1 : index
        %c0_35 = arith.constant 0 : index
        %65 = vector.load %arg6[%c1_34, %c0_35] : memref<8x128xf32, #tpu.memory_space<vmem>>, vector<1x128xf32>
        tpu.vector_store %arg6[%c1_34, %c0_35], %64 {strides = array<i32>} : memref<8x128xf32, #tpu.memory_space<vmem>>, vector<1x128xf32>,
      } else {
      }
    } else {
    }
    %c1_i32 = arith.constant 1 : i32
    %29 = arith.cmpi sge, %arg0, %c1_i32 : i32
    %30 = arith.extui %29 : i1 to i32
    %c0_i32_10 = arith.constant 0 : i32
    %31 = arith.cmpi ne, %30, %c0_i32_10 : i32
    scf.if %31 {
      %c0_11 = arith.constant 0 : index
      %c0_12 = arith.constant 0 : index
      %32 = vector.load %arg6[%c0_11, %c0_12] : memref<8x128xf32, #tpu.memory_space<vmem>>, vector<1x128xf32>
      %33 = vector.broadcast %32 : vector<1x128xf32> to vector<256x128xf32>
      %34 = arith.mulf %25, %33 : vector<256x128xf32>
      %c1_13 = arith.constant 1 : index
      %c0_14 = arith.constant 0 : index
      %35 = vector.load %arg6[%c1_13, %c0_14] : memref<8x128xf32, #tpu.memory_space<vmem>>, vector<1x128xf32>
      %36 = vector.broadcast %35 : vector<1x128xf32> to vector<256x128xf32>
      %37 = arith.addf %34, %36 : vector<256x128xf32>
      %cst = arith.constant 0.000000e+00 : f32
      %38 = vector.broadcast %cst : f32 to vector<256x128xf32>
      %39 = arith.maximumf %37, %38 : vector<256x128xf32>
      %40 = arith.truncf %39 : vector<256x128xf32> to vector<256x128xbf16>
      %c0_15 = arith.constant 0 : index
      %c0_16 = arith.constant 0 : index
      %41 = vector.load %arg4[%c0_15, %c0_16] : memref<128x128xbf16, #tpu.memory_space<vmem>>, vector<128x128xbf16>
      %cst_17 = arith.constant dense<0.000000e+00> : vector<256x128xf32>
      %42 = tpu.matmul %40, %41, %cst_17 {dimension_numbers = #tpu.dot_dimension_numbers<[1], [0], [0], [1], [0, 0, 1, 1], [], []>} : vector<256x128xbf16>, vector<128x128xbf16>, vector<256x128xf32> -> vector<256x128xf32>
      %c4 = arith.constant 4 : index
      %c0_18 = arith.constant 0 : index
      %43 = vector.load %arg3[%c4, %c0_18] : memref<16x256xf32, #tpu.memory_space<vmem>>, vector<1x128xf32>
      %44 = vector.broadcast %43 : vector<1x128xf32> to vector<256x128xf32>
      %45 = arith.addf %42, %44 : vector<256x128xf32>
      %c1_i32_19 = arith.constant 1 : i32
      %46 = arith.cmpi eq, %arg0, %c1_i32_19 : i32
      %47 = arith.extui %46 : i1 to i32
      %c0_i32_20 = arith.constant 0 : i32
      %48 = arith.cmpi ne, %47, %c0_i32_20 : i32
      scf.if %48 {
        %c0_22 = arith.constant 0 : index
        %c0_23 = arith.constant 0 : index
        %52 = vector.load %arg8[%c0_22, %c0_23] : memref<2x128xf32, #tpu.memory_space<vmem>>, vector<1x128xf32>
        %cst_24 = arith.constant dense<0.000000e+00> : vector<128xf32>
        %53 = vector.multi_reduction <add>, %45, %cst_24 [0] : vector<256x128xf32> to vector<128xf32>
        %54 = vector.shape_cast %53 : vector<128xf32> to vector<1x128xf32>
        %55 = arith.addf %52, %54 : vector<1x128xf32>
        %c0_25 = arith.constant 0 : index
        %c0_26 = arith.constant 0 : index
        %56 = vector.load %arg8[%c0_25, %c0_26] : memref<2x128xf32, #tpu.memory_space<vmem>>, vector<1x128xf32>
        tpu.vector_store %arg8[%c0_25, %c0_26], %55 {strides = array<i32>} : memref<2x128xf32, #tpu.memory_space<vmem>>, vector<1x128xf32>,
        %c1_27 = arith.constant 1 : index
        %c0_28 = arith.constant 0 : index
        %57 = vector.load %arg8[%c1_27, %c0_28] : memref<2x128xf32, #tpu.memory_space<vmem>>, vector<1x128xf32>
        %58 = arith.mulf %45, %45 : vector<256x128xf32>
        %cst_29 = arith.constant dense<0.000000e+00> : vector<128xf32>
        %59 = vector.multi_reduction <add>, %58, %cst_29 [0] : vector<256x128xf32> to vector<128xf32>
        %60 = vector.shape_cast %59 : vector<128xf32> to vector<1x128xf32>
        %61 = arith.addf %57, %60 : vector<1x128xf32>
        %c1_30 = arith.constant 1 : index
        %c0_31 = arith.constant 0 : index
        %62 = vector.load %arg8[%c1_30, %c0_31] : memref<2x128xf32, #tpu.memory_space<vmem>>, vector<1x128xf32>
        tpu.vector_store %arg8[%c1_30, %c0_31], %61 {strides = array<i32>} : memref<2x128xf32, #tpu.memory_space<vmem>>, vector<1x128xf32>,
        %c1_i32_32 = arith.constant 1 : i32
        %63 = arith.cmpi eq, %arg1, %c1_i32_32 : i32
        %64 = arith.extui %63 : i1 to i32
        %c0_i32_33 = arith.constant 0 : i32
        %65 = arith.cmpi ne, %64, %c0_i32_33 : i32
        scf.if %65 {
          %c8 = arith.constant 8 : index
          %c0_34 = arith.constant 0 : index
          %66 = vector.load %arg3[%c8, %c0_34] : memref<16x256xf32, #tpu.memory_space<vmem>>, vector<1x128xf32>
          %c9 = arith.constant 9 : index
          %c0_35 = arith.constant 0 : index
          %67 = vector.load %arg3[%c9, %c0_35] : memref<16x256xf32, #tpu.memory_space<vmem>>, vector<1x128xf32>
          %c0_36 = arith.constant 0 : index
          %c0_37 = arith.constant 0 : index
          %68 = vector.load %arg8[%c0_36, %c0_37] : memref<2x128xf32, #tpu.memory_space<vmem>>, vector<1x128xf32>
          %cst_38 = arith.constant 0.001953125 : f32
          %69 = vector.broadcast %cst_38 : f32 to vector<1x128xf32>
          %70 = arith.mulf %68, %69 : vector<1x128xf32>
          %c1_39 = arith.constant 1 : index
          %c0_40 = arith.constant 0 : index
          %71 = vector.load %arg8[%c1_39, %c0_40] : memref<2x128xf32, #tpu.memory_space<vmem>>, vector<1x128xf32>
          %cst_41 = arith.constant 0.001953125 : f32
          %72 = vector.broadcast %cst_41 : f32 to vector<1x128xf32>
          %73 = arith.mulf %71, %72 : vector<1x128xf32>
          %74 = arith.mulf %70, %70 : vector<1x128xf32>
          %75 = arith.subf %73, %74 : vector<1x128xf32>
          %cst_42 = arith.constant 0.000000e+00 : f32
          %76 = vector.broadcast %cst_42 : f32 to vector<1x128xf32>
          %77 = arith.maximumf %75, %76 : vector<1x128xf32>
          %cst_43 = arith.constant 9.99999974E-6 : f32
          %78 = vector.broadcast %cst_43 : f32 to vector<1x128xf32>
          %79 = arith.addf %77, %78 : vector<1x128xf32>
          %80 = math.rsqrt %79 : vector<1x128xf32>
          %81 = arith.mulf %66, %80 : vector<1x128xf32>
          %c2_44 = arith.constant 2 : index
          %c0_45 = arith.constant 0 : index
          %82 = vector.load %arg6[%c2_44, %c0_45] : memref<8x128xf32, #tpu.memory_space<vmem>>, vector<1x128xf32>
          tpu.vector_store %arg6[%c2_44, %c0_45], %81 {strides = array<i32>} : memref<8x128xf32, #tpu.memory_space<vmem>>, vector<1x128xf32>,
          %83 = arith.mulf %70, %81 : vector<1x128xf32>
          %84 = arith.subf %67, %83 : vector<1x128xf32>
          %c3_46 = arith.constant 3 : index
          %c0_47 = arith.constant 0 : index
          %85 = vector.load %arg6[%c3_46, %c0_47] : memref<8x128xf32, #tpu.memory_space<vmem>>, vector<1x128xf32>
          tpu.vector_store %arg6[%c3_46, %c0_47], %84 {strides = array<i32>} : memref<8x128xf32, #tpu.memory_space<vmem>>, vector<1x128xf32>,
        } else {
        }
      } else {
      }
      %c2_i32 = arith.constant 2 : i32
      %49 = arith.cmpi eq, %arg0, %c2_i32 : i32
      %50 = arith.extui %49 : i1 to i32
      %c0_i32_21 = arith.constant 0 : i32
      %51 = arith.cmpi ne, %50, %c0_i32_21 : i32
      scf.if %51 {
        %c2_22 = arith.constant 2 : index
        %c0_23 = arith.constant 0 : index
        %52 = vector.load %arg6[%c2_22, %c0_23] : memref<8x128xf32, #tpu.memory_space<vmem>>, vector<1x128xf32>
        %53 = vector.broadcast %52 : vector<1x128xf32> to vector<256x128xf32>
        %54 = arith.mulf %45, %53 : vector<256x128xf32>
        %c3_24 = arith.constant 3 : index
        %c0_25 = arith.constant 0 : index
        %55 = vector.load %arg6[%c3_24, %c0_25] : memref<8x128xf32, #tpu.memory_space<vmem>>, vector<1x128xf32>
        %56 = vector.broadcast %55 : vector<1x128xf32> to vector<256x128xf32>
        %57 = arith.addf %54, %56 : vector<256x128xf32>
        %cst_26 = arith.constant 0.000000e+00 : f32
        %58 = vector.broadcast %cst_26 : f32 to vector<256x128xf32>
        %59 = arith.maximumf %57, %58 : vector<256x128xf32>
        %60 = arith.truncf %59 : vector<256x128xf32> to vector<256x128xbf16>
        %c0_27 = arith.constant 0 : index
        %c0_28 = arith.constant 0 : index
        %61 = vector.load %arg5[%c0_27, %c0_28] : memref<128x128xbf16, #tpu.memory_space<vmem>>, vector<128x128xbf16>
        %cst_29 = arith.constant dense<0.000000e+00> : vector<256x128xf32>
        %62 = tpu.matmul %60, %61, %cst_29 {dimension_numbers = #tpu.dot_dimension_numbers<[1], [0], [0], [1], [0, 0, 1, 1], [], []>} : vector<256x128xbf16>, vector<128x128xbf16>, vector<256x128xf32> -> vector<256x128xf32>
        %c5 = arith.constant 5 : index
        %c0_30 = arith.constant 0 : index
        %63 = vector.load %arg3[%c5, %c0_30] : memref<16x256xf32, #tpu.memory_space<vmem>>, vector<1x128xf32>
        %64 = vector.broadcast %63 : vector<1x128xf32> to vector<256x128xf32>
        %65 = arith.addf %62, %64 : vector<256x128xf32>
        %c0_31 = arith.constant 0 : index
        %c0_32 = arith.constant 0 : index
        %66 = vector.load %arg9[%c0_31, %c0_32] : memref<2x128xf32, #tpu.memory_space<vmem>>, vector<1x128xf32>
        %cst_33 = arith.constant dense<0.000000e+00> : vector<128xf32>
        %67 = vector.multi_reduction <add>, %65, %cst_33 [0] : vector<256x128xf32> to vector<128xf32>
        %68 = vector.shape_cast %67 : vector<128xf32> to vector<1x128xf32>
        %69 = arith.addf %66, %68 : vector<1x128xf32>
        %c0_34 = arith.constant 0 : index
        %c0_35 = arith.constant 0 : index
        %70 = vector.load %arg9[%c0_34, %c0_35] : memref<2x128xf32, #tpu.memory_space<vmem>>, vector<1x128xf32>
        tpu.vector_store %arg9[%c0_34, %c0_35], %69 {strides = array<i32>} : memref<2x128xf32, #tpu.memory_space<vmem>>, vector<1x128xf32>,
        %c1_36 = arith.constant 1 : index
        %c0_37 = arith.constant 0 : index
        %71 = vector.load %arg9[%c1_36, %c0_37] : memref<2x128xf32, #tpu.memory_space<vmem>>, vector<1x128xf32>
        %72 = arith.mulf %65, %65 : vector<256x128xf32>
        %cst_38 = arith.constant dense<0.000000e+00> : vector<128xf32>
        %73 = vector.multi_reduction <add>, %72, %cst_38 [0] : vector<256x128xf32> to vector<128xf32>
        %74 = vector.shape_cast %73 : vector<128xf32> to vector<1x128xf32>
        %75 = arith.addf %71, %74 : vector<1x128xf32>
        %c1_39 = arith.constant 1 : index
        %c0_40 = arith.constant 0 : index
        %76 = vector.load %arg9[%c1_39, %c0_40] : memref<2x128xf32, #tpu.memory_space<vmem>>, vector<1x128xf32>
        tpu.vector_store %arg9[%c1_39, %c0_40], %75 {strides = array<i32>} : memref<2x128xf32, #tpu.memory_space<vmem>>, vector<1x128xf32>,
        %c1_i32_41 = arith.constant 1 : i32
        %77 = arith.cmpi eq, %arg1, %c1_i32_41 : i32
        %78 = arith.extui %77 : i1 to i32
        %c0_i32_42 = arith.constant 0 : i32
        %79 = arith.cmpi ne, %78, %c0_i32_42 : i32
        scf.if %79 {
          %c10 = arith.constant 10 : index
          %c0_43 = arith.constant 0 : index
          %80 = vector.load %arg3[%c10, %c0_43] : memref<16x256xf32, #tpu.memory_space<vmem>>, vector<1x128xf32>
          %c11 = arith.constant 11 : index
          %c0_44 = arith.constant 0 : index
          %81 = vector.load %arg3[%c11, %c0_44] : memref<16x256xf32, #tpu.memory_space<vmem>>, vector<1x128xf32>
          %c0_45 = arith.constant 0 : index
          %c0_46 = arith.constant 0 : index
          %82 = vector.load %arg9[%c0_45, %c0_46] : memref<2x128xf32, #tpu.memory_space<vmem>>, vector<1x128xf32>
          %cst_47 = arith.constant 0.001953125 : f32
          %83 = vector.broadcast %cst_47 : f32 to vector<1x128xf32>
          %84 = arith.mulf %82, %83 : vector<1x128xf32>
          %c1_48 = arith.constant 1 : index
          %c0_49 = arith.constant 0 : index
          %85 = vector.load %arg9[%c1_48, %c0_49] : memref<2x128xf32, #tpu.memory_space<vmem>>, vector<1x128xf32>
          %cst_50 = arith.constant 0.001953125 : f32
          %86 = vector.broadcast %cst_50 : f32 to vector<1x128xf32>
          %87 = arith.mulf %85, %86 : vector<1x128xf32>
          %88 = arith.mulf %84, %84 : vector<1x128xf32>
          %89 = arith.subf %87, %88 : vector<1x128xf32>
          %cst_51 = arith.constant 0.000000e+00 : f32
          %90 = vector.broadcast %cst_51 : f32 to vector<1x128xf32>
          %91 = arith.maximumf %89, %90 : vector<1x128xf32>
          %cst_52 = arith.constant 9.99999974E-6 : f32
          %92 = vector.broadcast %cst_52 : f32 to vector<1x128xf32>
          %93 = arith.addf %91, %92 : vector<1x128xf32>
          %94 = math.rsqrt %93 : vector<1x128xf32>
          %95 = arith.mulf %80, %94 : vector<1x128xf32>
          %c4_53 = arith.constant 4 : index
          %c0_54 = arith.constant 0 : index
          %96 = vector.load %arg6[%c4_53, %c0_54] : memref<8x128xf32, #tpu.memory_space<vmem>>, vector<1x128xf32>
          tpu.vector_store %arg6[%c4_53, %c0_54], %95 {strides = array<i32>} : memref<8x128xf32, #tpu.memory_space<vmem>>, vector<1x128xf32>,
          %97 = arith.mulf %84, %95 : vector<1x128xf32>
          %98 = arith.subf %81, %97 : vector<1x128xf32>
          %c5_55 = arith.constant 5 : index
          %c0_56 = arith.constant 0 : index
          %99 = vector.load %arg6[%c5_55, %c0_56] : memref<8x128xf32, #tpu.memory_space<vmem>>, vector<1x128xf32>
          tpu.vector_store %arg6[%c5_55, %c0_56], %98 {strides = array<i32>} : memref<8x128xf32, #tpu.memory_space<vmem>>, vector<1x128xf32>,
        } else {
        }
      } else {
      }
    } else {
    }
    return
  }
  func.func @transform_0(%arg0: i32, %arg1: i32) -> (i32, i32) {
    %c0_i32 = arith.constant 0 : i32
    %c0_i32_0 = arith.constant 0 : i32
    return %arg1, %c0_i32 : i32, i32
  }
  func.func @transform_1(%arg0: i32, %arg1: i32) -> (i32, i32) {
    %c0_i32 = arith.constant 0 : i32
    %c0_i32_0 = arith.constant 0 : i32
    %c0_i32_1 = arith.constant 0 : i32
    return %c0_i32, %c0_i32_0 : i32, i32
  }
  func.func @transform_2(%arg0: i32, %arg1: i32) -> (i32, i32) {
    %c0_i32 = arith.constant 0 : i32
    %c0_i32_0 = arith.constant 0 : i32
    %c0_i32_1 = arith.constant 0 : i32
    return %c0_i32, %c0_i32_0 : i32, i32
  }
  func.func @transform_3(%arg0: i32, %arg1: i32) -> (i32, i32) {
    %c0_i32 = arith.constant 0 : i32
    %c0_i32_0 = arith.constant 0 : i32
    %c0_i32_1 = arith.constant 0 : i32
    return %c0_i32, %c0_i32_0 : i32, i32
  }
  func.func @transform_4(%arg0: i32, %arg1: i32) -> (i32, i32) {
    %c0_i32 = arith.constant 0 : i32
    %c0_i32_0 = arith.constant 0 : i32
    %c0_i32_1 = arith.constant 0 : i32
    return %c0_i32, %c0_i32_0 : i32, i32
  }
}

</mosaic_0001>

<llo_original>
// kernel: tpu_custom_call.1
$region0: #{tpu_custom_call.1}
  #allocation0 [shape = 'u32[]', space=smem, size = 0x4, offset = 0x4, fixed_abs, tag = 'smem constant byte address 0x4 - core index']
  #allocation1 [shape = 'u32[144,128]{1,0:T(1,128)}', space=vmem, size = 0x12000, scoped, tag = 'internal scratch']
  #allocation2 [shape = 'f32[2,128]{1,0:T(2,128)}', space=vmem, size = 0x400, scoped, tag = 'scratch operand']
  #allocation3 [shape = 'f32[2,128]{1,0:T(2,128)}', space=vmem, size = 0x400, scoped, tag = 'scratch operand']
  #allocation4 [shape = 'f32[2,128]{1,0:T(2,128)}', space=vmem, size = 0x400, scoped, tag = 'scratch operand']
  %s0 = inlined_call_operand.vmem [shape: f32[512,4], index: 0, kind: input, shape index: {}]
  %s1 = inlined_call_operand.vmem [shape: f32[16,256], index: 1, kind: input, shape index: {}]
  %s2 = inlined_call_operand.vmem [shape: bf16[128,128], index: 2, kind: input, shape index: {}]
  %s3 = inlined_call_operand.vmem [shape: bf16[128,128], index: 3, kind: input, shape index: {}]
  %s4 = inlined_call_operand.hbm [shape: f32[8,128], index: 4, kind: output, shape index: {}]
  %s5 = sld [smem:[#allocation0]]
  $region81: #{tpu_custom_call.1} parent=0
    _
  %s7 = ssub.s32 1, %s5
  %s8 = scalar_select 0, %s7, %s5
  $region1: #{tpu_custom_call.1} parent=0
    #allocation5 [shape = 'u8[4096]{0}', space=vmem, size = 0x1000, scoped, tag = 'output window, operand 0, single buffered']
    #allocation6 [shape = 's32[2]{0}', space=sflag, size = 0x8, scoped, tag = 'scoped memory for tpu_custom_call.1']
    %9 = vsyncpa [#allocation6], 0
    loop: start=0, step=1, limit=8
    $region2: #{tpu_custom_call.1} parent=1 // loop_pre_header
      _
    $region3: #{tpu_custom_call.1} parent=1 // loop_header
      %s11 = sphi 0, %s15
      %p12 = scmp.ge.s32.totalorder %s11, 8
      %s18 = sphi 0, %s30
      %s19 = sphi 0, %s26
      %s20 = sphi 0, %s18
      %s21 = sphi 0, %s19
      %s22 = sphi 0, %s20
      %s23 = sphi 0, %s21
      %s33 = sphi 0, %s35
      %s36 = sphi 0, %s33
      %s37 = sphi 0, %s36
      %s53 = sphi 0, %s37
      %s57 = sphi 0, %s57
      %s59 = sphi 0, %s57
      %s60 = sphi 0, %s59
      %s74 = sphi 0, %s60
      %s78 = sphi 0, %s78
      %s80 = sphi 0, %s78
      %s81 = sphi 0, %s80
      %s95 = sphi 0, %s81
      %s99 = sphi 0, %s99
      %s101 = sphi 0, %s99
      %s102 = sphi 0, %s101
      %s116 = sphi 0, %s102
      %s120 = sphi 0, %s120
      %s122 = sphi 0, %s120
      %s123 = sphi 0, %s122
      %s137 = sphi 0, %s123
    $region4: #{tpu_custom_call.1} parent=1 // loop_header_branch
      %14 = sbr.rel (%p12) target = $region8
    $region5: #{tpu_custom_call.1} parent=1 // loop_body
      %s16 = ssub.s32 %s11, 1
      %s17 = ssub.s32 %s11, 2
      %s24 = sadd.s32 1, %s19
      %p25 = scmp.ge.s32.totalorder %s24, 2
      %s26 = scalar_select %p25, 0, %s24
      %s27 = sadd.s32 1, %s18
      %s28 = scalar_select %p25, %s27, %s18
      %p29 = scmp.ge.s32.totalorder %s28, 3
      %s30 = scalar_select %p29, 0, %s28
      %s31 = ssub.s32 %s19, %s26
      %p32 = scmp.eq.s32.totalorder %s31, 0
      %s34 = sadd.s32 %s33, 1
      %s35 = scalar_select %p32, %s33, %s34
      %p38 = pneg %p32
      %p39 = scmp.eq.s32.totalorder %s11, 5
      %p40 = por %p38, %p39
      %p41 = scmp.ne.s32.totalorder %s33, %s36
      %p42 = scmp.eq.s32.totalorder %s11, 0
      %p43 = por %p41, %p42
      %p44 = scmp.ne.s32.totalorder %s33, %s36
      %p45 = scmp.eq.s32.totalorder %s16, 5
      %p46 = por %p44, %p45
      %p47 = scmp.ne.s32.totalorder %s36, %s37
      %p48 = scmp.eq.s32.totalorder %s16, 0
      %p49 = por %p47, %p48
      %p50 = scmp.ne.s32.totalorder %s36, %s37
      %p51 = scmp.eq.s32.totalorder %s17, 5
      %p52 = por %p50, %p51
      %p54 = scmp.ne.s32.totalorder %s37, %s53
      %p55 = scmp.eq.s32.totalorder %s17, 0
      %p56 = por %p54, %p55
      %s58 = sadd.s32 %s57, 1
      %p61 = scmp.eq.s32.totalorder %s11, 5
      %p62 = scmp.ne.s32.totalorder %s57, %s59
      %p63 = scmp.eq.s32.totalorder %s11, 0
      %p64 = por %p62, %p63
      %p65 = scmp.ne.s32.totalorder %s57, %s59
      %p66 = scmp.eq.s32.totalorder %s16, 5
      %p67 = por %p65, %p66
      %p68 = scmp.ne.s32.totalorder %s59, %s60
      %p69 = scmp.eq.s32.totalorder %s16, 0
      %p70 = por %p68, %p69
      %p71 = scmp.ne.s32.totalorder %s59, %s60
      %p72 = scmp.eq.s32.totalorder %s17, 5
      %p73 = por %p71, %p72
      %p75 = scmp.ne.s32.totalorder %s60, %s74
      %p76 = scmp.eq.s32.totalorder %s17, 0
      %p77 = por %p75, %p76
      %s79 = sadd.s32 %s78, 1
      %p82 = scmp.eq.s32.totalorder %s11, 5
      %p83 = scmp.ne.s32.totalorder %s78, %s80
      %p84 = scmp.eq.s32.totalorder %s11, 0
      %p85 = por %p83, %p84
      %p86 = scmp.ne.s32.totalorder %s78, %s80
      %p87 = scmp.eq.s32.totalorder %s16, 5
      %p88 = por %p86, %p87
      %p89 = scmp.ne.s32.totalorder %s80, %s81
      %p90 = scmp.eq.s32.totalorder %s16, 0
      %p91 = por %p89, %p90
      %p92 = scmp.ne.s32.totalorder %s80, %s81
      %p93 = scmp.eq.s32.totalorder %s17, 5
      %p94 = por %p92, %p93
      %p96 = scmp.ne.s32.totalorder %s81, %s95
      %p97 = scmp.eq.s32.totalorder %s17, 0
      %p98 = por %p96, %p97
      %s100 = sadd.s32 %s99, 1
      %p103 = scmp.eq.s32.totalorder %s11, 5
      %p104 = scmp.ne.s32.totalorder %s99, %s101
      %p105 = scmp.eq.s32.totalorder %s11, 0
      %p106 = por %p104, %p105
      %p107 = scmp.ne.s32.totalorder %s99, %s101
      %p108 = scmp.eq.s32.totalorder %s16, 5
      %p109 = por %p107, %p108
      %p110 = scmp.ne.s32.totalorder %s101, %s102
      %p111 = scmp.eq.s32.totalorder %s16, 0
      %p112 = por %p110, %p111
      %p113 = scmp.ne.s32.totalorder %s101, %s102
      %p114 = scmp.eq.s32.totalorder %s17, 5
      %p115 = por %p113, %p114
      %p117 = scmp.ne.s32.totalorder %s102, %s116
      %p118 = scmp.eq.s32.totalorder %s17, 0
      %p119 = por %p117, %p118
      %s121 = sadd.s32 %s120, 1
      %p124 = scmp.eq.s32.totalorder %s11, 5
      %p125 = scmp.ne.s32.totalorder %s120, %s122
      %p126 = scmp.eq.s32.totalorder %s11, 0
      %p127 = por %p125, %p126
      %p128 = scmp.ne.s32.totalorder %s120, %s122
      %p129 = scmp.eq.s32.totalorder %s16, 5
      %p130 = por %p128, %p129
      %p131 = scmp.ne.s32.totalorder %s122, %s123
      %p132 = scmp.eq.s32.totalorder %s16, 0
      %p133 = por %p131, %p132
      %p134 = scmp.ne.s32.totalorder %s122, %s123
      %p135 = scmp.eq.s32.totalorder %s17, 5
      %p136 = por %p134, %p135
      %p138 = scmp.ne.s32.totalorder %s123, %s137
      %p139 = scmp.eq.s32.totalorder %s17, 0
      %p140 = por %p138, %p139
      %p141 = scmp.le.s32.totalorder 1, %s11
      %p142 = scmp.lt.s32.totalorder %s11, 7
      %p143 = pnand %p141, %p142
      %p144 = pneg %p143
      // Predicated region
      $region9: #{tpu_custom_call.1} parent=5 // pred_check
        _
      $region10: #{tpu_custom_call.1} parent=5 // pred_check_branch
        %146 = sbr.rel (%p143) target = $region12
      $region11: #{tpu_custom_call.1} parent=5 // pred_region
        %s147 = ssub.s32 %s11, 1
        // Predicated region
        $region13: #{tpu_custom_call.1} parent=11 // pred_check
          %p148 = pneg %p70
        $region14: #{tpu_custom_call.1} parent=11 // pred_check_branch
          %150 = sbr.rel (%p148) target = $region16
        $region15: #{tpu_custom_call.1} parent=11 // pred_region
          _
        $region16: #{tpu_custom_call.1} parent=11 // pred_fallthru
          _
        // Predicated region
        $region17: #{tpu_custom_call.1} parent=11 // pred_check
          %p151 = pneg %p91
        $region18: #{tpu_custom_call.1} parent=11 // pred_check_branch
          %153 = sbr.rel (%p151) target = $region20
        $region19: #{tpu_custom_call.1} parent=11 // pred_region
          _
        $region20: #{tpu_custom_call.1} parent=11 // pred_fallthru
          _
        // Predicated region
        $region21: #{tpu_custom_call.1} parent=11 // pred_check
          %p154 = pneg %p112
        $region22: #{tpu_custom_call.1} parent=11 // pred_check_branch
          %156 = sbr.rel (%p154) target = $region24
        $region23: #{tpu_custom_call.1} parent=11 // pred_region
          _
        $region24: #{tpu_custom_call.1} parent=11 // pred_fallthru
          _
      $region12: #{tpu_custom_call.1} parent=5 // pred_fallthru
        _
      %p157 = scmp.lt.s32.totalorder %s11, 6
      // Predicated region
      $region25: #{tpu_custom_call.1} parent=5 // pred_check
        %p158 = pneg %p157
      $region26: #{tpu_custom_call.1} parent=5 // pred_check_branch
        %160 = sbr.rel (%p158) target = $region28
      $region27: #{tpu_custom_call.1} parent=5 // pred_region
        // Predicated region
        $region29: #{tpu_custom_call.1} parent=27 // pred_check
          %p161 = pneg %p43
        $region30: #{tpu_custom_call.1} parent=27 // pred_check_branch
          %163 = sbr.rel (%p161) target = $region32
        $region31: #{tpu_custom_call.1} parent=27 // pred_region
          %s164 = smul.u32 32, %s19
          %p165 = scmp.lt.s32.totalorder %s164, 63
          %s166 = scalar_select %p165, %s164, 63
          %s167 = smul.addr %s166, 8
          %s168 = scalar_lea.vmem %s0, %s167
          %s169 = smul.u32 32, %s19
        $region32: #{tpu_custom_call.1} parent=27 // pred_fallthru
          _
      $region28: #{tpu_custom_call.1} parent=5 // pred_fallthru
        _
      %p170 = scmp.le.s32.totalorder 1, %s11
      %p171 = scmp.lt.s32.totalorder %s11, 7
      %p172 = pnand %p170, %p171
      %p173 = pneg %p172
      // Predicated region
      $region33: #{tpu_custom_call.1} parent=5 // pred_check
        _
      $region34: #{tpu_custom_call.1} parent=5 // pred_check_branch
        %175 = sbr.rel (%p172) target = $region36
      $region35: #{tpu_custom_call.1} parent=5 // pred_region
        %s176 = ssub.s32 %s11, 1
        %s177 = smul.u32 32, %s21
        %p178 = scmp.lt.s32.totalorder %s177, 63
        %s179 = scalar_select %p178, %s177, 63
        %s180 = smul.addr %s179, 8
        %s181 = scalar_lea.vmem %s0, %s180
        %p182 = pneg %p49
        %p183 = pneg %p46
        %p184 = pneg %p70
        %p185 = pneg %p67
        %p186 = pneg %p91
        %p187 = pneg %p88
        %p188 = pneg %p112
        %p189 = pneg %p109
        %p190 = pneg %p133
        %p191 = pneg %p130
        %s192 = smul.u32 32, %s21
        %p193 = scmp.lt.s32.totalorder %s192, 63
        %s194 = scalar_select %p193, %s192, 63
        %s195 = smul.addr %s194, 8
        %s196 = scalar_lea.vmem %s0, %s195
        %s197 = smul.u32 32, %s21
        %p199 = scmp.eq.s32.totalorder %s20, 0
        %p200 = scmp.eq.s32.totalorder %s21, 0
        %p201 = pnand %p199, %p200
        %p202 = pneg %p201
        // Predicated region
        $region37: #{tpu_custom_call.1} parent=35 // pred_check
          _
        $region38: #{tpu_custom_call.1} parent=35 // pred_check_branch
          %204 = sbr.rel (%p201) target = $region40
        $region39: #{tpu_custom_call.1} parent=35 // pred_region
          %205 = vst [vmem:[#allocation2] sm:$0x3] 0.0
          %206 = vst [vmem:[#allocation3] sm:$0x3] 0.0
          %207 = vst [vmem:[#allocation4] sm:$0x3] 0.0
          %208 = vst [vmem:[#allocation5] sm:$0xff] 0.0
        $region40: #{tpu_custom_call.1} parent=35 // pred_fallthru
          _
        %v209 = vld [vmem:[%s196] sm:$0xff]
        %v210 = vld [vmem:[%s196 + $0x8] sm:$0xff]
        %v211 = vld [vmem:[%s196 + $0x10] sm:$0xff]
        %v212 = vld [vmem:[%s196 + $0x18] sm:$0xff]
        %v213 = vld [vmem:[%s196 + $0x20] sm:$0xff]
        %v214 = vld [vmem:[%s196 + $0x28] sm:$0xff]
        %v215 = vld [vmem:[%s196 + $0x30] sm:$0xff]
        %v216 = vld [vmem:[%s196 + $0x38] sm:$0xff]
        %v217 = vld [vmem:[%s196 + $0x40] sm:$0xff]
        %v218 = vld [vmem:[%s196 + $0x48] sm:$0xff]
        %v219 = vld [vmem:[%s196 + $0x50] sm:$0xff]
        %v220 = vld [vmem:[%s196 + $0x58] sm:$0xff]
        %v221 = vld [vmem:[%s196 + $0x60] sm:$0xff]
        %v222 = vld [vmem:[%s196 + $0x68] sm:$0xff]
        %v223 = vld [vmem:[%s196 + $0x70] sm:$0xff]
        %v224 = vld [vmem:[%s196 + $0x78] sm:$0xff]
        %v225 = vld [vmem:[%s196 + $0x80] sm:$0xff]
        %v226 = vld [vmem:[%s196 + $0x88] sm:$0xff]
        %v227 = vld [vmem:[%s196 + $0x90] sm:$0xff]
        %v228 = vld [vmem:[%s196 + $0x98] sm:$0xff]
        %v229 = vld [vmem:[%s196 + $0xa0] sm:$0xff]
        %v230 = vld [vmem:[%s196 + $0xa8] sm:$0xff]
        %v231 = vld [vmem:[%s196 + $0xb0] sm:$0xff]
        %v232 = vld [vmem:[%s196 + $0xb8] sm:$0xff]
        %v233 = vld [vmem:[%s196 + $0xc0] sm:$0xff]
        %v234 = vld [vmem:[%s196 + $0xc8] sm:$0xff]
        %v235 = vld [vmem:[%s196 + $0xd0] sm:$0xff]
        %v236 = vld [vmem:[%s196 + $0xd8] sm:$0xff]
        %v237 = vld [vmem:[%s196 + $0xe0] sm:$0xff]
        %v238 = vld [vmem:[%s196 + $0xe8] sm:$0xff]
        %v239 = vld [vmem:[%s196 + $0xf0] sm:$0xff]
        %v240 = vld [vmem:[%s196 + $0xf8] sm:$0xff]
        %v241 = vld [vmem:[%s1] ss:$0 sm:$0xff]
        %243 = vset.pattern.permute.xlu0 1
        %244 = vperm.xlu0 %243, %v209
        %v245 = vpop.permute.xlu0 %244
        %248 = vset.pattern.permute.xlu0 1
        %249 = vperm.xlu0 %248, %v210
        %v250 = vpop.permute.xlu0 %249
        %253 = vset.pattern.permute.xlu0 1
        %254 = vperm.xlu0 %253, %v211
        %v255 = vpop.permute.xlu0 %254
        %258 = vset.pattern.permute.xlu0 1
        %259 = vperm.xlu0 %258, %v212
        %v260 = vpop.permute.xlu0 %259
        %263 = vset.pattern.permute.xlu0 1
        %264 = vperm.xlu0 %263, %v213
        %v265 = vpop.permute.xlu0 %264
        %268 = vset.pattern.permute.xlu0 1
        %269 = vperm.xlu0 %268, %v214
        %v270 = vpop.permute.xlu0 %269
        %273 = vset.pattern.permute.xlu0 1
        %274 = vperm.xlu0 %273, %v215
        %v275 = vpop.permute.xlu0 %274
        %278 = vset.pattern.permute.xlu0 1
        %279 = vperm.xlu0 %278, %v216
        %v280 = vpop.permute.xlu0 %279
        %283 = vset.pattern.permute.xlu0 1
        %284 = vperm.xlu0 %283, %v217
        %v285 = vpop.permute.xlu0 %284
        %288 = vset.pattern.permute.xlu0 1
        %289 = vperm.xlu0 %288, %v218
        %v290 = vpop.permute.xlu0 %289
        %293 = vset.pattern.permute.xlu0 1
        %294 = vperm.xlu0 %293, %v219
        %v295 = vpop.permute.xlu0 %294
        %298 = vset.pattern.permute.xlu0 1
        %299 = vperm.xlu0 %298, %v220
        %v300 = vpop.permute.xlu0 %299
        %303 = vset.pattern.permute.xlu0 1
        %304 = vperm.xlu0 %303, %v221
        %v305 = vpop.permute.xlu0 %304
        %308 = vset.pattern.permute.xlu0 1
        %309 = vperm.xlu0 %308, %v222
        %v310 = vpop.permute.xlu0 %309
        %313 = vset.pattern.permute.xlu0 1
        %314 = vperm.xlu0 %313, %v223
        %v315 = vpop.permute.xlu0 %314
        %318 = vset.pattern.permute.xlu0 1
        %319 = vperm.xlu0 %318, %v224
        %v320 = vpop.permute.xlu0 %319
        %323 = vset.pattern.permute.xlu0 1
        %324 = vperm.xlu0 %323, %v225
        %v325 = vpop.permute.xlu0 %324
        %328 = vset.pattern.permute.xlu0 1
        %329 = vperm.xlu0 %328, %v226
        %v330 = vpop.permute.xlu0 %329
        %333 = vset.pattern.permute.xlu0 1
        %334 = vperm.xlu0 %333, %v227
        %v335 = vpop.permute.xlu0 %334
        %338 = vset.pattern.permute.xlu0 1
        %339 = vperm.xlu0 %338, %v228
        %v340 = vpop.permute.xlu0 %339
        %343 = vset.pattern.permute.xlu0 1
        %344 = vperm.xlu0 %343, %v229
        %v345 = vpop.permute.xlu0 %344
        %348 = vset.pattern.permute.xlu0 1
        %349 = vperm.xlu0 %348, %v230
        %v350 = vpop.permute.xlu0 %349
        %353 = vset.pattern.permute.xlu0 1
        %354 = vperm.xlu0 %353, %v231
        %v355 = vpop.permute.xlu0 %354
        %358 = vset.pattern.permute.xlu0 1
        %359 = vperm.xlu0 %358, %v232
        %v360 = vpop.permute.xlu0 %359
        %363 = vset.pattern.permute.xlu0 1
        %364 = vperm.xlu0 %363, %v233
        %v365 = vpop.permute.xlu0 %364
        %368 = vset.pattern.permute.xlu0 1
        %369 = vperm.xlu0 %368, %v234
        %v370 = vpop.permute.xlu0 %369
        %373 = vset.pattern.permute.xlu0 1
        %374 = vperm.xlu0 %373, %v235
        %v375 = vpop.permute.xlu0 %374
        %378 = vset.pattern.permute.xlu0 1
        %379 = vperm.xlu0 %378, %v236
        %v380 = vpop.permute.xlu0 %379
        %383 = vset.pattern.permute.xlu0 1
        %384 = vperm.xlu0 %383, %v237
        %v385 = vpop.permute.xlu0 %384
        %388 = vset.pattern.permute.xlu0 1
        %389 = vperm.xlu0 %388, %v238
        %v390 = vpop.permute.xlu0 %389
        %393 = vset.pattern.permute.xlu0 1
        %394 = vperm.xlu0 %393, %v239
        %v395 = vpop.permute.xlu0 %394
        %398 = vset.pattern.permute.xlu0 1
        %399 = vperm.xlu0 %398, %v240
        %v400 = vpop.permute.xlu0 %399
        %v402 = vmul.f32 %v245, %v241
        %v403 = vmul.f32 %v250, %v241
        %v404 = vmul.f32 %v255, %v241
        %v405 = vmul.f32 %v260, %v241
        %v406 = vmul.f32 %v265, %v241
        %v407 = vmul.f32 %v270, %v241
        %v408 = vmul.f32 %v275, %v241
        %v409 = vmul.f32 %v280, %v241
        %v410 = vmul.f32 %v285, %v241
        %v411 = vmul.f32 %v290, %v241
        %v412 = vmul.f32 %v295, %v241
        %v413 = vmul.f32 %v300, %v241
        %v414 = vmul.f32 %v305, %v241
        %v415 = vmul.f32 %v310, %v241
        %v416 = vmul.f32 %v315, %v241
        %v417 = vmul.f32 %v320, %v241
        %v418 = vmul.f32 %v325, %v241
        %v419 = vmul.f32 %v330, %v241
        %v420 = vmul.f32 %v335, %v241
        %v421 = vmul.f32 %v340, %v241
        %v422 = vmul.f32 %v345, %v241
        %v423 = vmul.f32 %v350, %v241
        %v424 = vmul.f32 %v355, %v241
        %v425 = vmul.f32 %v360, %v241
        %v426 = vmul.f32 %v365, %v241
        %v427 = vmul.f32 %v370, %v241
        %v428 = vmul.f32 %v375, %v241
        %v429 = vmul.f32 %v380, %v241
        %v430 = vmul.f32 %v385, %v241
        %v431 = vmul.f32 %v390, %v241
        %v432 = vmul.f32 %v395, %v241
        %v433 = vmul.f32 %v400, %v241
        %v434 = vld [vmem:[%s1 + $0x1] ss:$0 sm:$0xff]
        %435 = vset.pattern.permute.xlu0 2
        %436 = vperm.xlu0 %435, %v209
        %v437 = vpop.permute.xlu0 %436
        %439 = vset.pattern.permute.xlu0 2
        %440 = vperm.xlu0 %439, %v210
        %v441 = vpop.permute.xlu0 %440
        %443 = vset.pattern.permute.xlu0 2
        %444 = vperm.xlu0 %443, %v211
        %v445 = vpop.permute.xlu0 %444
        %447 = vset.pattern.permute.xlu0 2
        %448 = vperm.xlu0 %447, %v212
        %v449 = vpop.permute.xlu0 %448
        %451 = vset.pattern.permute.xlu0 2
        %452 = vperm.xlu0 %451, %v213
        %v453 = vpop.permute.xlu0 %452
        %455 = vset.pattern.permute.xlu0 2
        %456 = vperm.xlu0 %455, %v214
        %v457 = vpop.permute.xlu0 %456
        %459 = vset.pattern.permute.xlu0 2
        %460 = vperm.xlu0 %459, %v215
        %v461 = vpop.permute.xlu0 %460
        %463 = vset.pattern.permute.xlu0 2
        %464 = vperm.xlu0 %463, %v216
        %v465 = vpop.permute.xlu0 %464
        %467 = vset.pattern.permute.xlu0 2
        %468 = vperm.xlu0 %467, %v217
        %v469 = vpop.permute.xlu0 %468
        %471 = vset.pattern.permute.xlu0 2
        %472 = vperm.xlu0 %471, %v218
        %v473 = vpop.permute.xlu0 %472
        %475 = vset.pattern.permute.xlu0 2
        %476 = vperm.xlu0 %475, %v219
        %v477 = vpop.permute.xlu0 %476
        %479 = vset.pattern.permute.xlu0 2
        %480 = vperm.xlu0 %479, %v220
        %v481 = vpop.permute.xlu0 %480
        %483 = vset.pattern.permute.xlu0 2
        %484 = vperm.xlu0 %483, %v221
        %v485 = vpop.permute.xlu0 %484
        %487 = vset.pattern.permute.xlu0 2
        %488 = vperm.xlu0 %487, %v222
        %v489 = vpop.permute.xlu0 %488
        %491 = vset.pattern.permute.xlu0 2
        %492 = vperm.xlu0 %491, %v223
        %v493 = vpop.permute.xlu0 %492
        %495 = vset.pattern.permute.xlu0 2
        %496 = vperm.xlu0 %495, %v224
        %v497 = vpop.permute.xlu0 %496
        %499 = vset.pattern.permute.xlu0 2
        %500 = vperm.xlu0 %499, %v225
        %v501 = vpop.permute.xlu0 %500
        %503 = vset.pattern.permute.xlu0 2
        %504 = vperm.xlu0 %503, %v226
        %v505 = vpop.permute.xlu0 %504
        %507 = vset.pattern.permute.xlu0 2
        %508 = vperm.xlu0 %507, %v227
        %v509 = vpop.permute.xlu0 %508
        %511 = vset.pattern.permute.xlu0 2
        %512 = vperm.xlu0 %511, %v228
        %v513 = vpop.permute.xlu0 %512
        %515 = vset.pattern.permute.xlu0 2
        %516 = vperm.xlu0 %515, %v229
        %v517 = vpop.permute.xlu0 %516
        %519 = vset.pattern.permute.xlu0 2
        %520 = vperm.xlu0 %519, %v230
        %v521 = vpop.permute.xlu0 %520
        %523 = vset.pattern.permute.xlu0 2
        %524 = vperm.xlu0 %523, %v231
        %v525 = vpop.permute.xlu0 %524
        %527 = vset.pattern.permute.xlu0 2
        %528 = vperm.xlu0 %527, %v232
        %v529 = vpop.permute.xlu0 %528
        %531 = vset.pattern.permute.xlu0 2
        %532 = vperm.xlu0 %531, %v233
        %v533 = vpop.permute.xlu0 %532
        %535 = vset.pattern.permute.xlu0 2
        %536 = vperm.xlu0 %535, %v234
        %v537 = vpop.permute.xlu0 %536
        %539 = vset.pattern.permute.xlu0 2
        %540 = vperm.xlu0 %539, %v235
        %v541 = vpop.permute.xlu0 %540
        %543 = vset.pattern.permute.xlu0 2
        %544 = vperm.xlu0 %543, %v236
        %v545 = vpop.permute.xlu0 %544
        %547 = vset.pattern.permute.xlu0 2
        %548 = vperm.xlu0 %547, %v237
        %v549 = vpop.permute.xlu0 %548
        %551 = vset.pattern.permute.xlu0 2
        %552 = vperm.xlu0 %551, %v238
        %v553 = vpop.permute.xlu0 %552
        %555 = vset.pattern.permute.xlu0 2
        %556 = vperm.xlu0 %555, %v239
        %v557 = vpop.permute.xlu0 %556
        %559 = vset.pattern.permute.xlu0 2
        %560 = vperm.xlu0 %559, %v240
        %v561 = vpop.permute.xlu0 %560
        %v563 = vmul.f32 %v437, %v434
        %v564 = vmul.f32 %v441, %v434
        %v565 = vmul.f32 %v445, %v434
        %v566 = vmul.f32 %v449, %v434
        %v567 = vmul.f32 %v453, %v434
        %v568 = vmul.f32 %v457, %v434
        %v569 = vmul.f32 %v461, %v434
        %v570 = vmul.f32 %v465, %v434
        %v571 = vmul.f32 %v469, %v434
        %v572 = vmul.f32 %v473, %v434
        %v573 = vmul.f32 %v477, %v434
        %v574 = vmul.f32 %v481, %v434
        %v575 = vmul.f32 %v485, %v434
        %v576 = vmul.f32 %v489, %v434
        %v577 = vmul.f32 %v493, %v434
        %v578 = vmul.f32 %v497, %v434
        %v579 = vmul.f32 %v501, %v434
        %v580 = vmul.f32 %v505, %v434
        %v581 = vmul.f32 %v509, %v434
        %v582 = vmul.f32 %v513, %v434
        %v583 = vmul.f32 %v517, %v434
        %v584 = vmul.f32 %v521, %v434
        %v585 = vmul.f32 %v525, %v434
        %v586 = vmul.f32 %v529, %v434
        %v587 = vmul.f32 %v533, %v434
        %v588 = vmul.f32 %v537, %v434
        %v589 = vmul.f32 %v541, %v434
        %v590 = vmul.f32 %v545, %v434
        %v591 = vmul.f32 %v549, %v434
        %v592 = vmul.f32 %v553, %v434
        %v593 = vmul.f32 %v557, %v434
        %v594 = vmul.f32 %v561, %v434
        %v595 = vadd.f32 %v402, %v563
        %v596 = vadd.f32 %v403, %v564
        %v597 = vadd.f32 %v404, %v565
        %v598 = vadd.f32 %v405, %v566
        %v599 = vadd.f32 %v406, %v567
        %v600 = vadd.f32 %v407, %v568
        %v601 = vadd.f32 %v408, %v569
        %v602 = vadd.f32 %v409, %v570
        %v603 = vadd.f32 %v410, %v571
        %v604 = vadd.f32 %v411, %v572
        %v605 = vadd.f32 %v412, %v573
        %v606 = vadd.f32 %v413, %v574
        %v607 = vadd.f32 %v414, %v575
        %v608 = vadd.f32 %v415, %v576
        %v609 = vadd.f32 %v416, %v577
        %v610 = vadd.f32 %v417, %v578
        %v611 = vadd.f32 %v418, %v579
        %v612 = vadd.f32 %v419, %v580
        %v613 = vadd.f32 %v420, %v581
        %v614 = vadd.f32 %v421, %v582
        %v615 = vadd.f32 %v422, %v583
        %v616 = vadd.f32 %v423, %v584
        %v617 = vadd.f32 %v424, %v585
        %v618 = vadd.f32 %v425, %v586
        %v619 = vadd.f32 %v426, %v587
        %v620 = vadd.f32 %v427, %v588
        %v621 = vadd.f32 %v428, %v589
        %v622 = vadd.f32 %v429, %v590
        %v623 = vadd.f32 %v430, %v591
        %v624 = vadd.f32 %v431, %v592
        %v625 = vadd.f32 %v432, %v593
        %v626 = vadd.f32 %v433, %v594
        %v627 = vld [vmem:[%s1 + $0x2] ss:$0 sm:$0xff]
        %628 = vset.pattern.permute.xlu0 3
        %629 = vperm.xlu0 %628, %v209
        %v630 = vpop.permute.xlu0 %629
        %632 = vset.pattern.permute.xlu0 3
        %633 = vperm.xlu0 %632, %v210
        %v634 = vpop.permute.xlu0 %633
        %636 = vset.pattern.permute.xlu0 3
        %637 = vperm.xlu0 %636, %v211
        %v638 = vpop.permute.xlu0 %637
        %640 = vset.pattern.permute.xlu0 3
        %641 = vperm.xlu0 %640, %v212
        %v642 = vpop.permute.xlu0 %641
        %644 = vset.pattern.permute.xlu0 3
        %645 = vperm.xlu0 %644, %v213
        %v646 = vpop.permute.xlu0 %645
        %648 = vset.pattern.permute.xlu0 3
        %649 = vperm.xlu0 %648, %v214
        %v650 = vpop.permute.xlu0 %649
        %652 = vset.pattern.permute.xlu0 3
        %653 = vperm.xlu0 %652, %v215
        %v654 = vpop.permute.xlu0 %653
        %656 = vset.pattern.permute.xlu0 3
        %657 = vperm.xlu0 %656, %v216
        %v658 = vpop.permute.xlu0 %657
        %660 = vset.pattern.permute.xlu0 3
        %661 = vperm.xlu0 %660, %v217
        %v662 = vpop.permute.xlu0 %661
        %664 = vset.pattern.permute.xlu0 3
        %665 = vperm.xlu0 %664, %v218
        %v666 = vpop.permute.xlu0 %665
        %668 = vset.pattern.permute.xlu0 3
        %669 = vperm.xlu0 %668, %v219
        %v670 = vpop.permute.xlu0 %669
        %672 = vset.pattern.permute.xlu0 3
        %673 = vperm.xlu0 %672, %v220
        %v674 = vpop.permute.xlu0 %673
        %676 = vset.pattern.permute.xlu0 3
        %677 = vperm.xlu0 %676, %v221
        %v678 = vpop.permute.xlu0 %677
        %680 = vset.pattern.permute.xlu0 3
        %681 = vperm.xlu0 %680, %v222
        %v682 = vpop.permute.xlu0 %681
        %684 = vset.pattern.permute.xlu0 3
        %685 = vperm.xlu0 %684, %v223
        %v686 = vpop.permute.xlu0 %685
        %688 = vset.pattern.permute.xlu0 3
        %689 = vperm.xlu0 %688, %v224
        %v690 = vpop.permute.xlu0 %689
        %692 = vset.pattern.permute.xlu0 3
        %693 = vperm.xlu0 %692, %v225
        %v694 = vpop.permute.xlu0 %693
        %696 = vset.pattern.permute.xlu0 3
        %697 = vperm.xlu0 %696, %v226
        %v698 = vpop.permute.xlu0 %697
        %700 = vset.pattern.permute.xlu0 3
        %701 = vperm.xlu0 %700, %v227
        %v702 = vpop.permute.xlu0 %701
        %704 = vset.pattern.permute.xlu0 3
        %705 = vperm.xlu0 %704, %v228
        %v706 = vpop.permute.xlu0 %705
        %708 = vset.pattern.permute.xlu0 3
        %709 = vperm.xlu0 %708, %v229
        %v710 = vpop.permute.xlu0 %709
        %712 = vset.pattern.permute.xlu0 3
        %713 = vperm.xlu0 %712, %v230
        %v714 = vpop.permute.xlu0 %713
        %716 = vset.pattern.permute.xlu0 3
        %717 = vperm.xlu0 %716, %v231
        %v718 = vpop.permute.xlu0 %717
        %720 = vset.pattern.permute.xlu0 3
        %721 = vperm.xlu0 %720, %v232
        %v722 = vpop.permute.xlu0 %721
        %724 = vset.pattern.permute.xlu0 3
        %725 = vperm.xlu0 %724, %v233
        %v726 = vpop.permute.xlu0 %725
        %728 = vset.pattern.permute.xlu0 3
        %729 = vperm.xlu0 %728, %v234
        %v730 = vpop.permute.xlu0 %729
        %732 = vset.pattern.permute.xlu0 3
        %733 = vperm.xlu0 %732, %v235
        %v734 = vpop.permute.xlu0 %733
        %736 = vset.pattern.permute.xlu0 3
        %737 = vperm.xlu0 %736, %v236
        %v738 = vpop.permute.xlu0 %737
        %740 = vset.pattern.permute.xlu0 3
        %741 = vperm.xlu0 %740, %v237
        %v742 = vpop.permute.xlu0 %741
        %744 = vset.pattern.permute.xlu0 3
        %745 = vperm.xlu0 %744, %v238
        %v746 = vpop.permute.xlu0 %745
        %748 = vset.pattern.permute.xlu0 3
        %749 = vperm.xlu0 %748, %v239
        %v750 = vpop.permute.xlu0 %749
        %752 = vset.pattern.permute.xlu0 3
        %753 = vperm.xlu0 %752, %v240
        %v754 = vpop.permute.xlu0 %753
        %v756 = vmul.f32 %v630, %v627
        %v757 = vmul.f32 %v634, %v627
        %v758 = vmul.f32 %v638, %v627
        %v759 = vmul.f32 %v642, %v627
        %v760 = vmul.f32 %v646, %v627
        %v761 = vmul.f32 %v650, %v627
        %v762 = vmul.f32 %v654, %v627
        %v763 = vmul.f32 %v658, %v627
        %v764 = vmul.f32 %v662, %v627
        %v765 = vmul.f32 %v666, %v627
        %v766 = vmul.f32 %v670, %v627
        %v767 = vmul.f32 %v674, %v627
        %v768 = vmul.f32 %v678, %v627
        %v769 = vmul.f32 %v682, %v627
        %v770 = vmul.f32 %v686, %v627
        %v771 = vmul.f32 %v690, %v627
        %v772 = vmul.f32 %v694, %v627
        %v773 = vmul.f32 %v698, %v627
        %v774 = vmul.f32 %v702, %v627
        %v775 = vmul.f32 %v706, %v627
        %v776 = vmul.f32 %v710, %v627
        %v777 = vmul.f32 %v714, %v627
        %v778 = vmul.f32 %v718, %v627
        %v779 = vmul.f32 %v722, %v627
        %v780 = vmul.f32 %v726, %v627
        %v781 = vmul.f32 %v730, %v627
        %v782 = vmul.f32 %v734, %v627
        %v783 = vmul.f32 %v738, %v627
        %v784 = vmul.f32 %v742, %v627
        %v785 = vmul.f32 %v746, %v627
        %v786 = vmul.f32 %v750, %v627
        %v787 = vmul.f32 %v754, %v627
        %v788 = vadd.f32 %v595, %v756
        %v789 = vadd.f32 %v596, %v757
        %v790 = vadd.f32 %v597, %v758
        %v791 = vadd.f32 %v598, %v759
        %v792 = vadd.f32 %v599, %v760
        %v793 = vadd.f32 %v600, %v761
        %v794 = vadd.f32 %v601, %v762
        %v795 = vadd.f32 %v602, %v763
        %v796 = vadd.f32 %v603, %v764
        %v797 = vadd.f32 %v604, %v765
        %v798 = vadd.f32 %v605, %v766
        %v799 = vadd.f32 %v606, %v767
        %v800 = vadd.f32 %v607, %v768
        %v801 = vadd.f32 %v608, %v769
        %v802 = vadd.f32 %v609, %v770
        %v803 = vadd.f32 %v610, %v771
        %v804 = vadd.f32 %v611, %v772
        %v805 = vadd.f32 %v612, %v773
        %v806 = vadd.f32 %v613, %v774
        %v807 = vadd.f32 %v614, %v775
        %v808 = vadd.f32 %v615, %v776
        %v809 = vadd.f32 %v616, %v777
        %v810 = vadd.f32 %v617, %v778
        %v811 = vadd.f32 %v618, %v779
        %v812 = vadd.f32 %v619, %v780
        %v813 = vadd.f32 %v620, %v781
        %v814 = vadd.f32 %v621, %v782
        %v815 = vadd.f32 %v622, %v783
        %v816 = vadd.f32 %v623, %v784
        %v817 = vadd.f32 %v624, %v785
        %v818 = vadd.f32 %v625, %v786
        %v819 = vadd.f32 %v626, %v787
        %v820 = vld [vmem:[%s1 + $0x3] ss:$0 sm:$0xff]
        %v821 = vadd.f32 %v788, %v820
        %v822 = vadd.f32 %v789, %v820
        %v823 = vadd.f32 %v790, %v820
        %v824 = vadd.f32 %v791, %v820
        %v825 = vadd.f32 %v792, %v820
        %v826 = vadd.f32 %v793, %v820
        %v827 = vadd.f32 %v794, %v820
        %v828 = vadd.f32 %v795, %v820
        %v829 = vadd.f32 %v796, %v820
        %v830 = vadd.f32 %v797, %v820
        %v831 = vadd.f32 %v798, %v820
        %v832 = vadd.f32 %v799, %v820
        %v833 = vadd.f32 %v800, %v820
        %v834 = vadd.f32 %v801, %v820
        %v835 = vadd.f32 %v802, %v820
        %v836 = vadd.f32 %v803, %v820
        %v837 = vadd.f32 %v804, %v820
        %v838 = vadd.f32 %v805, %v820
        %v839 = vadd.f32 %v806, %v820
        %v840 = vadd.f32 %v807, %v820
        %v841 = vadd.f32 %v808, %v820
        %v842 = vadd.f32 %v809, %v820
        %v843 = vadd.f32 %v810, %v820
        %v844 = vadd.f32 %v811, %v820
        %v845 = vadd.f32 %v812, %v820
        %v846 = vadd.f32 %v813, %v820
        %v847 = vadd.f32 %v814, %v820
        %v848 = vadd.f32 %v815, %v820
        %v849 = vadd.f32 %v816, %v820
        %v850 = vadd.f32 %v817, %v820
        %v851 = vadd.f32 %v818, %v820
        %v852 = vadd.f32 %v819, %v820
        // Predicated region
        $region41: #{tpu_custom_call.1} parent=35 // pred_check
          %p853 = pneg %p199
        $region42: #{tpu_custom_call.1} parent=35 // pred_check_branch
          %855 = sbr.rel (%p853) target = $region44
        $region43: #{tpu_custom_call.1} parent=35 // pred_region
          %v856 = vld [vmem:[#allocation2] sm:$0x1]
          %v857 = vadd.f32 %v821, %v822
          %v858 = vadd.f32 %v857, %v823
          %v859 = vadd.f32 %v858, %v824
          %v860 = vadd.f32 %v859, %v825
          %v861 = vadd.f32 %v860, %v826
          %v862 = vadd.f32 %v861, %v827
          %v863 = vadd.f32 %v862, %v828
          %v864 = vadd.f32 %v863, %v829
          %v865 = vadd.f32 %v864, %v830
          %v866 = vadd.f32 %v865, %v831
          %v867 = vadd.f32 %v866, %v832
          %v868 = vadd.f32 %v867, %v833
          %v869 = vadd.f32 %v868, %v834
          %v870 = vadd.f32 %v869, %v835
          %v871 = vadd.f32 %v870, %v836
          %v872 = vadd.f32 %v871, %v837
          %v873 = vadd.f32 %v872, %v838
          %v874 = vadd.f32 %v873, %v839
          %v875 = vadd.f32 %v874, %v840
          %v876 = vadd.f32 %v875, %v841
          %v877 = vadd.f32 %v876, %v842
          %v878 = vadd.f32 %v877, %v843
          %v879 = vadd.f32 %v878, %v844
          %v880 = vadd.f32 %v879, %v845
          %v881 = vadd.f32 %v880, %v846
          %v882 = vadd.f32 %v881, %v847
          %v883 = vadd.f32 %v882, %v848
          %v884 = vadd.f32 %v883, %v849
          %v885 = vadd.f32 %v884, %v850
          %v886 = vadd.f32 %v885, %v851
          %v887 = vadd.f32 %v886, %v852
          %v888 = vrot.slane %v887, 4
          %v889 = vadd.f32 %v887, %v888
          %v890 = vrot.slane %v889, 2
          %v891 = vadd.f32 %v889, %v890
          %v892 = vrot.slane %v891, 1
          %v893 = vadd.f32 %v891, %v892
          %v894 = vadd.f32 %v856, %v893
          %895 = vst [vmem:[#allocation2] sm:$0x1] %v894
          %v896 = vld [vmem:[#allocation2 + $0x1] sm:$0x1]
          %v897 = vmul.f32 %v821, %v821
          %v898 = vmul.f32 %v822, %v822
          %v899 = vmul.f32 %v823, %v823
          %v900 = vmul.f32 %v824, %v824
          %v901 = vmul.f32 %v825, %v825
          %v902 = vmul.f32 %v826, %v826
          %v903 = vmul.f32 %v827, %v827
          %v904 = vmul.f32 %v828, %v828
          %v905 = vmul.f32 %v829, %v829
          %v906 = vmul.f32 %v830, %v830
          %v907 = vmul.f32 %v831, %v831
          %v908 = vmul.f32 %v832, %v832
          %v909 = vmul.f32 %v833, %v833
          %v910 = vmul.f32 %v834, %v834
          %v911 = vmul.f32 %v835, %v835
          %v912 = vmul.f32 %v836, %v836
          %v913 = vmul.f32 %v837, %v837
          %v914 = vmul.f32 %v838, %v838
          %v915 = vmul.f32 %v839, %v839
          %v916 = vmul.f32 %v840, %v840
          %v917 = vmul.f32 %v841, %v841
          %v918 = vmul.f32 %v842, %v842
          %v919 = vmul.f32 %v843, %v843
          %v920 = vmul.f32 %v844, %v844
          %v921 = vmul.f32 %v845, %v845
          %v922 = vmul.f32 %v846, %v846
          %v923 = vmul.f32 %v847, %v847
          %v924 = vmul.f32 %v848, %v848
          %v925 = vmul.f32 %v849, %v849
          %v926 = vmul.f32 %v850, %v850
          %v927 = vmul.f32 %v851, %v851
          %v928 = vmul.f32 %v852, %v852
          %v929 = vadd.f32 %v897, %v898
          %v930 = vadd.f32 %v929, %v899
          %v931 = vadd.f32 %v930, %v900
          %v932 = vadd.f32 %v931, %v901
          %v933 = vadd.f32 %v932, %v902
          %v934 = vadd.f32 %v933, %v903
          %v935 = vadd.f32 %v934, %v904
          %v936 = vadd.f32 %v935, %v905
          %v937 = vadd.f32 %v936, %v906
          %v938 = vadd.f32 %v937, %v907
          %v939 = vadd.f32 %v938, %v908
          %v940 = vadd.f32 %v939, %v909
          %v941 = vadd.f32 %v940, %v910
          %v942 = vadd.f32 %v941, %v911
          %v943 = vadd.f32 %v942, %v912
          %v944 = vadd.f32 %v943, %v913
          %v945 = vadd.f32 %v944, %v914
          %v946 = vadd.f32 %v945, %v915
          %v947 = vadd.f32 %v946, %v916
          %v948 = vadd.f32 %v947, %v917
          %v949 = vadd.f32 %v948, %v918
          %v950 = vadd.f32 %v949, %v919
          %v951 = vadd.f32 %v950, %v920
          %v952 = vadd.f32 %v951, %v921
          %v953 = vadd.f32 %v952, %v922
          %v954 = vadd.f32 %v953, %v923
          %v955 = vadd.f32 %v954, %v924
          %v956 = vadd.f32 %v955, %v925
          %v957 = vadd.f32 %v956, %v926
          %v958 = vadd.f32 %v957, %v927
          %v959 = vadd.f32 %v958, %v928
          %v960 = vrot.slane %v959, 4
          %v961 = vadd.f32 %v959, %v960
          %v962 = vrot.slane %v961, 2
          %v963 = vadd.f32 %v961, %v962
          %v964 = vrot.slane %v963, 1
          %v965 = vadd.f32 %v963, %v964
          %v966 = vadd.f32 %v896, %v965
          %967 = vst [vmem:[#allocation2 + $0x1] sm:$0x1] %v966
          %p968 = scmp.eq.s32.totalorder %s21, 1
          // Predicated region
          $region45: #{tpu_custom_call.1} parent=43 // pred_check
            %p969 = pneg %p968
          $region46: #{tpu_custom_call.1} parent=43 // pred_check_branch
            %971 = sbr.rel (%p969) target = $region48
          $region47: #{tpu_custom_call.1} parent=43 // pred_region
            %v972 = vld [vmem:[%s1 + $0x6] ss:$0 sm:$0xff]
            %v973 = vld [vmem:[%s1 + $0x7] ss:$0 sm:$0xff]
            %v974 = vld [vmem:[#allocation2] sm:$0x1]
            %v975 = vmul.f32 %v974, 0.001953125
            %v976 = vld [vmem:[#allocation2 + $0x1] sm:$0x1]
            %v977 = vmul.f32 %v976, 0.001953125
            %v978 = vmul.f32 %v975, %v975
            %v979 = vsub.f32 %v977, %v978
            %v980 = vmax.f32 %v979, 0.0
            %v981 = vadd.f32 %v980, 1e-05
            %v982 = vrsqrt.pop %v981
            %v983 = vmul.f32 %v972, %v982
            %984 = vst [vmem:[#allocation5] sm:$0x1] %v983
            %v985 = vmul.f32 %v975, %v983
            %v986 = vsub.f32 %v973, %v985
            %987 = vst [vmem:[#allocation5 + $0x1] sm:$0x1] %v986
          $region48: #{tpu_custom_call.1} parent=43 // pred_fallthru
            _
        $region44: #{tpu_custom_call.1} parent=35 // pred_fallthru
          _
        %p988 = scmp.ge.s32.totalorder %s20, 1
        // Predicated region
        $region49: #{tpu_custom_call.1} parent=35 // pred_check
          %p989 = pneg %p988
        $region50: #{tpu_custom_call.1} parent=35 // pred_check_branch
          %991 = sbr.rel (%p989) target = $region52
        $region51: #{tpu_custom_call.1} parent=35 // pred_region
          %v992 = vld [vmem:[#allocation5] sm:$0x1]
          %v993 = vlaneseq
          %v994 = vshrl.u32 %v993, 7
          %v995 = vsub.s32 0, %v994
          %v996 = vrot.slane %v992, %v995
          %v997 = vmul.f32 %v821, %v996
          %v998 = vmul.f32 %v822, %v996
          %v999 = vmul.f32 %v823, %v996
          %v1000 = vmul.f32 %v824, %v996
          %v1001 = vmul.f32 %v825, %v996
          %v1002 = vmul.f32 %v826, %v996
          %v1003 = vmul.f32 %v827, %v996
          %v1004 = vmul.f32 %v828, %v996
          %v1005 = vmul.f32 %v829, %v996
          %v1006 = vmul.f32 %v830, %v996
          %v1007 = vmul.f32 %v831, %v996
          %v1008 = vmul.f32 %v832, %v996
          %v1009 = vmul.f32 %v833, %v996
          %v1010 = vmul.f32 %v834, %v996
          %v1011 = vmul.f32 %v835, %v996
          %v1012 = vmul.f32 %v836, %v996
          %v1013 = vmul.f32 %v837, %v996
          %v1014 = vmul.f32 %v838, %v996
          %v1015 = vmul.f32 %v839, %v996
          %v1016 = vmul.f32 %v840, %v996
          %v1017 = vmul.f32 %v841, %v996
          %v1018 = vmul.f32 %v842, %v996
          %v1019 = vmul.f32 %v843, %v996
          %v1020 = vmul.f32 %v844, %v996
          %v1021 = vmul.f32 %v845, %v996
          %v1022 = vmul.f32 %v846, %v996
          %v1023 = vmul.f32 %v847, %v996
          %v1024 = vmul.f32 %v848, %v996
          %v1025 = vmul.f32 %v849, %v996
          %v1026 = vmul.f32 %v850, %v996
          %v1027 = vmul.f32 %v851, %v996
          %v1028 = vmul.f32 %v852, %v996
          %v1029 = vld [vmem:[#allocation5 + $0x1] sm:$0x1]
          %v1030 = vlaneseq
          %v1031 = vshrl.u32 %v1030, 7
          %v1032 = vsub.s32 0, %v1031
          %v1033 = vrot.slane %v1029, %v1032
          %v1034 = vadd.f32 %v997, %v1033
          %v1035 = vadd.f32 %v998, %v1033
          %v1036 = vadd.f32 %v999, %v1033
          %v1037 = vadd.f32 %v1000, %v1033
          %v1038 = vadd.f32 %v1001, %v1033
          %v1039 = vadd.f32 %v1002, %v1033
          %v1040 = vadd.f32 %v1003, %v1033
          %v1041 = vadd.f32 %v1004, %v1033
          %v1042 = vadd.f32 %v1005, %v1033
          %v1043 = vadd.f32 %v1006, %v1033
          %v1044 = vadd.f32 %v1007, %v1033
          %v1045 = vadd.f32 %v1008, %v1033
          %v1046 = vadd.f32 %v1009, %v1033
          %v1047 = vadd.f32 %v1010, %v1033
          %v1048 = vadd.f32 %v1011, %v1033
          %v1049 = vadd.f32 %v1012, %v1033
          %v1050 = vadd.f32 %v1013, %v1033
          %v1051 = vadd.f32 %v1014, %v1033
          %v1052 = vadd.f32 %v1015, %v1033
          %v1053 = vadd.f32 %v1016, %v1033
          %v1054 = vadd.f32 %v1017, %v1033
          %v1055 = vadd.f32 %v1018, %v1033
          %v1056 = vadd.f32 %v1019, %v1033
          %v1057 = vadd.f32 %v1020, %v1033
          %v1058 = vadd.f32 %v1021, %v1033
          %v1059 = vadd.f32 %v1022, %v1033
          %v1060 = vadd.f32 %v1023, %v1033
          %v1061 = vadd.f32 %v1024, %v1033
          %v1062 = vadd.f32 %v1025, %v1033
          %v1063 = vadd.f32 %v1026, %v1033
          %v1064 = vadd.f32 %v1027, %v1033
          %v1065 = vadd.f32 %v1028, %v1033
          %v1066 = vmax.f32 %v1034, 0.0
          %v1067 = vmax.f32 %v1035, 0.0
          %v1068 = vmax.f32 %v1036, 0.0
          %v1069 = vmax.f32 %v1037, 0.0
          %v1070 = vmax.f32 %v1038, 0.0
          %v1071 = vmax.f32 %v1039, 0.0
          %v1072 = vmax.f32 %v1040, 0.0
          %v1073 = vmax.f32 %v1041, 0.0
          %v1074 = vmax.f32 %v1042, 0.0
          %v1075 = vmax.f32 %v1043, 0.0
          %v1076 = vmax.f32 %v1044, 0.0
          %v1077 = vmax.f32 %v1045, 0.0
          %v1078 = vmax.f32 %v1046, 0.0
          %v1079 = vmax.f32 %v1047, 0.0
          %v1080 = vmax.f32 %v1048, 0.0
          %v1081 = vmax.f32 %v1049, 0.0
          %v1082 = vmax.f32 %v1050, 0.0
          %v1083 = vmax.f32 %v1051, 0.0
          %v1084 = vmax.f32 %v1052, 0.0
          %v1085 = vmax.f32 %v1053, 0.0
          %v1086 = vmax.f32 %v1054, 0.0
          %v1087 = vmax.f32 %v1055, 0.0
          %v1088 = vmax.f32 %v1056, 0.0
          %v1089 = vmax.f32 %v1057, 0.0
          %v1090 = vmax.f32 %v1058, 0.0
          %v1091 = vmax.f32 %v1059, 0.0
          %v1092 = vmax.f32 %v1060, 0.0
          %v1093 = vmax.f32 %v1061, 0.0
          %v1094 = vmax.f32 %v1062, 0.0
          %v1095 = vmax.f32 %v1063, 0.0
          %v1096 = vmax.f32 %v1064, 0.0
          %v1097 = vmax.f32 %v1065, 0.0
          %v1098 = vpack.c.bf16 %v1067, %v1066
          %v1099 = vpack.c.bf16 %v1069, %v1068
          %v1100 = vpack.c.bf16 %v1071, %v1070
          %v1101 = vpack.c.bf16 %v1073, %v1072
          %v1102 = vpack.c.bf16 %v1075, %v1074
          %v1103 = vpack.c.bf16 %v1077, %v1076
          %v1104 = vpack.c.bf16 %v1079, %v1078
          %v1105 = vpack.c.bf16 %v1081, %v1080
          %v1106 = vpack.c.bf16 %v1083, %v1082
          %v1107 = vpack.c.bf16 %v1085, %v1084
          %v1108 = vpack.c.bf16 %v1087, %v1086
          %v1109 = vpack.c.bf16 %v1089, %v1088
          %v1110 = vpack.c.bf16 %v1091, %v1090
          %v1111 = vpack.c.bf16 %v1093, %v1092
          %v1112 = vpack.c.bf16 %v1095, %v1094
          %v1113 = vpack.c.bf16 %v1097, %v1096
          %v1114 = vld [vmem:[%s2] sm:$0xf]
          %v1115 = vld [vmem:[%s2 + $0x4] sm:$0xf]
          %v1116 = vld [vmem:[%s2 + $0x8] sm:$0xf]
          %v1117 = vld [vmem:[%s2 + $0xc] sm:$0xf]
          %v1118 = vld [vmem:[%s2 + $0x10] sm:$0xf]
          %v1119 = vld [vmem:[%s2 + $0x14] sm:$0xf]
          %v1120 = vld [vmem:[%s2 + $0x18] sm:$0xf]
          %v1121 = vld [vmem:[%s2 + $0x1c] sm:$0xf]
          %v1122 = vld [vmem:[%s2 + $0x20] sm:$0xf]
          %v1123 = vld [vmem:[%s2 + $0x24] sm:$0xf]
          %v1124 = vld [vmem:[%s2 + $0x28] sm:$0xf]
          %v1125 = vld [vmem:[%s2 + $0x2c] sm:$0xf]
          %v1126 = vld [vmem:[%s2 + $0x30] sm:$0xf]
          %v1127 = vld [vmem:[%s2 + $0x34] sm:$0xf]
          %v1128 = vld [vmem:[%s2 + $0x38] sm:$0xf]
          %v1129 = vld [vmem:[%s2 + $0x3c] sm:$0xf]
          %v1130 = vld [vmem:[%s1 + $0x4] ss:$0 sm:$0xff]
          %v1147 = vunpack.c.l.b16 %v1114
          %v1148 = vunpack.c.l.b16 %v1115
          %v1149 = vunpack.c.l.b16 %v1116
          %v1150 = vunpack.c.l.b16 %v1117
          %v1151 = vunpack.c.l.b16 %v1118
          %v1152 = vunpack.c.l.b16 %v1119
          %v1153 = vunpack.c.l.b16 %v1120
          %v1154 = vunpack.c.l.b16 %v1121
          %v1155 = vunpack.c.l.b16 %v1122
          %v1156 = vunpack.c.l.b16 %v1123
          %v1157 = vunpack.c.l.b16 %v1124
          %v1158 = vunpack.c.l.b16 %v1125
          %v1159 = vunpack.c.l.b16 %v1126
          %v1160 = vunpack.c.l.b16 %v1127
          %v1161 = vunpack.c.l.b16 %v1128
          %v1162 = vunpack.c.l.b16 %v1129
          %v1163 = vpack.c.b16 %v1148, %v1147
          %v1164 = vpack.c.b16 %v1150, %v1149
          %v1165 = vpack.c.b16 %v1152, %v1151
          %v1166 = vpack.c.b16 %v1154, %v1153
          %v1167 = vpack.c.b16 %v1156, %v1155
          %v1168 = vpack.c.b16 %v1158, %v1157
          %v1169 = vpack.c.b16 %v1160, %v1159
          %v1170 = vpack.c.b16 %v1162, %v1161
          %1179 = vmatprep.subr.bf16.mxu0 0
          %1180 = vmatpush1.bf16.msra.mxu0 %v1170
          %1181 = vmatprep.subr.bf16.mxu0 0
          %1182 = vmatpush1.bf16.msra.mxu0 %v1169
          %1183 = vmatprep.subr.bf16.mxu0 0
          %1184 = vmatpush1.bf16.msra.mxu0 %v1168
          %1185 = vmatprep.subr.bf16.mxu0 0
          %1186 = vmatpush1.bf16.msra.mxu0 %v1167
          %1187 = vmatprep.subr.bf16.mxu0 0
          %1188 = vmatpush1.bf16.msra.mxu0 %v1166
          %1189 = vmatprep.subr.bf16.mxu0 0
          %1190 = vmatpush1.bf16.msra.mxu0 %v1165
          %1191 = vmatprep.subr.bf16.mxu0 0
          %1192 = vmatpush1.bf16.msra.mxu0 %v1164
          %1193 = vmatprep.subr.bf16.mxu0 0
          %1194 = vmatpush1.bf16.msra.mxu0 %v1163
          %1195 = vmatprep.subr.bf16.mxu0 0
          %1196 = vmatpush2.bf16.msra.mxu0 0
          %1197 = vmatprep.subr.bf16.mxu0 0
          %1198 = vmatpush2.bf16.msra.mxu0 0
          %1199 = vmatprep.subr.bf16.mxu0 0
          %1200 = vmatpush2.bf16.msra.mxu0 0
          %1201 = vmatprep.subr.bf16.mxu0 0
          %1202 = vmatpush2.bf16.msra.mxu0 0
          %1203 = vmatprep.subr.bf16.mxu0 0
          %1204 = vmatpush2.bf16.msra.mxu0 0
          %1205 = vmatprep.subr.bf16.mxu0 0
          %1206 = vmatpush2.bf16.msra.mxu0 0
          %1207 = vmatprep.subr.bf16.mxu0 0
          %1208 = vmatpush2.bf16.msra.mxu0 0
          %1209 = vmatprep.subr.bf16.mxu0 0
          %1210 = vmatpush2.bf16.msra.mxu0 0
          %1211 = vmatprep.mubr.bf16.mxu0 0
          %1212 = vmatmul.mubr.bf16.gmra.mxu0 %v1098
          %v1213 = vpop.f32.mrf.mxu0
          %v1214 = vadd.f32 %v1130, %v1213
          %v1215 = vpop.f32.mrf.mxu0
          %v1216 = vpop.f32.mrf.mxu0
          %v1217 = vadd.f32 %v1130, %v1216
          %v1218 = vpop.f32.mrf.mxu0
          %1219 = vmatprep.mubr.bf16.mxu0 0
          %1220 = vmatmul.mubr.bf16.gmra.mxu0 %v1099
          %v1221 = vpop.f32.mrf.mxu0
          %v1222 = vadd.f32 %v1130, %v1221
          %v1223 = vpop.f32.mrf.mxu0
          %v1224 = vpop.f32.mrf.mxu0
          %v1225 = vadd.f32 %v1130, %v1224
          %v1226 = vpop.f32.mrf.mxu0
          %1227 = vmatprep.mubr.bf16.mxu0 0
          %1228 = vmatmul.mubr.bf16.gmra.mxu0 %v1100
          %v1229 = vpop.f32.mrf.mxu0
          %v1230 = vadd.f32 %v1130, %v1229
          %v1231 = vpop.f32.mrf.mxu0
          %v1232 = vpop.f32.mrf.mxu0
          %v1233 = vadd.f32 %v1130, %v1232
          %v1234 = vpop.f32.mrf.mxu0
          %1235 = vmatprep.mubr.bf16.mxu0 0
          %1236 = vmatmul.mubr.bf16.gmra.mxu0 %v1101
          %v1237 = vpop.f32.mrf.mxu0
          %v1238 = vadd.f32 %v1130, %v1237
          %v1239 = vpop.f32.mrf.mxu0
          %v1240 = vpop.f32.mrf.mxu0
          %v1241 = vadd.f32 %v1130, %v1240
          %v1242 = vpop.f32.mrf.mxu0
          %1243 = vmatprep.mubr.bf16.mxu0 0
          %1244 = vmatmul.mubr.bf16.gmra.mxu0 %v1102
          %v1245 = vpop.f32.mrf.mxu0
          %v1246 = vadd.f32 %v1130, %v1245
          %v1247 = vpop.f32.mrf.mxu0
          %v1248 = vpop.f32.mrf.mxu0
          %v1249 = vadd.f32 %v1130, %v1248
          %v1250 = vpop.f32.mrf.mxu0
          %1251 = vmatprep.mubr.bf16.mxu0 0
          %1252 = vmatmul.mubr.bf16.gmra.mxu0 %v1103
          %v1253 = vpop.f32.mrf.mxu0
          %v1254 = vadd.f32 %v1130, %v1253
          %v1255 = vpop.f32.mrf.mxu0
          %v1256 = vpop.f32.mrf.mxu0
          %v1257 = vadd.f32 %v1130, %v1256
          %v1258 = vpop.f32.mrf.mxu0
          %1259 = vmatprep.mubr.bf16.mxu0 0
          %1260 = vmatmul.mubr.bf16.gmra.mxu0 %v1104
          %v1261 = vpop.f32.mrf.mxu0
          %v1262 = vadd.f32 %v1130, %v1261
          %v1263 = vpop.f32.mrf.mxu0
          %v1264 = vpop.f32.mrf.mxu0
          %v1265 = vadd.f32 %v1130, %v1264
          %v1266 = vpop.f32.mrf.mxu0
          %1267 = vmatprep.mubr.bf16.mxu0 0
          %1268 = vmatmul.mubr.bf16.gmra.mxu0 %v1105
          %v1269 = vpop.f32.mrf.mxu0
          %v1270 = vadd.f32 %v1130, %v1269
          %v1271 = vpop.f32.mrf.mxu0
          %v1272 = vpop.f32.mrf.mxu0
          %v1273 = vadd.f32 %v1130, %v1272
          %v1274 = vpop.f32.mrf.mxu0
          %1275 = vmatprep.mubr.bf16.mxu0 0
          %1276 = vmatmul.mubr.bf16.gmra.mxu0 %v1106
          %v1277 = vpop.f32.mrf.mxu0
          %v1278 = vadd.f32 %v1130, %v1277
          %v1279 = vpop.f32.mrf.mxu0
          %v1280 = vpop.f32.mrf.mxu0
          %v1281 = vadd.f32 %v1130, %v1280
          %v1282 = vpop.f32.mrf.mxu0
          %1283 = vmatprep.mubr.bf16.mxu0 0
          %1284 = vmatmul.mubr.bf16.gmra.mxu0 %v1107
          %v1285 = vpop.f32.mrf.mxu0
          %v1286 = vadd.f32 %v1130, %v1285
          %v1287 = vpop.f32.mrf.mxu0
          %v1288 = vpop.f32.mrf.mxu0
          %v1289 = vadd.f32 %v1130, %v1288
          %v1290 = vpop.f32.mrf.mxu0
          %1291 = vmatprep.mubr.bf16.mxu0 0
          %1292 = vmatmul.mubr.bf16.gmra.mxu0 %v1108
          %v1293 = vpop.f32.mrf.mxu0
          %v1294 = vadd.f32 %v1130, %v1293
          %v1295 = vpop.f32.mrf.mxu0
          %v1296 = vpop.f32.mrf.mxu0
          %v1297 = vadd.f32 %v1130, %v1296
          %v1298 = vpop.f32.mrf.mxu0
          %1299 = vmatprep.mubr.bf16.mxu0 0
          %1300 = vmatmul.mubr.bf16.gmra.mxu0 %v1109
          %v1301 = vpop.f32.mrf.mxu0
          %v1302 = vadd.f32 %v1130, %v1301
          %v1303 = vpop.f32.mrf.mxu0
          %v1304 = vpop.f32.mrf.mxu0
          %v1305 = vadd.f32 %v1130, %v1304
          %v1306 = vpop.f32.mrf.mxu0
          %1307 = vmatprep.mubr.bf16.mxu0 0
          %1308 = vmatmul.mubr.bf16.gmra.mxu0 %v1110
          %v1309 = vpop.f32.mrf.mxu0
          %v1310 = vadd.f32 %v1130, %v1309
          %v1311 = vpop.f32.mrf.mxu0
          %v1312 = vpop.f32.mrf.mxu0
          %v1313 = vadd.f32 %v1130, %v1312
          %v1314 = vpop.f32.mrf.mxu0
          %1315 = vmatprep.mubr.bf16.mxu0 0
          %1316 = vmatmul.mubr.bf16.gmra.mxu0 %v1111
          %v1317 = vpop.f32.mrf.mxu0
          %v1318 = vadd.f32 %v1130, %v1317
          %v1319 = vpop.f32.mrf.mxu0
          %v1320 = vpop.f32.mrf.mxu0
          %v1321 = vadd.f32 %v1130, %v1320
          %v1322 = vpop.f32.mrf.mxu0
          %1323 = vmatprep.mubr.bf16.mxu0 0
          %1324 = vmatmul.mubr.bf16.gmra.mxu0 %v1112
          %v1325 = vpop.f32.mrf.mxu0
          %v1326 = vadd.f32 %v1130, %v1325
          %v1327 = vpop.f32.mrf.mxu0
          %v1328 = vpop.f32.mrf.mxu0
          %v1329 = vadd.f32 %v1130, %v1328
          %v1330 = vpop.f32.mrf.mxu0
          %1331 = vmatprep.mubr.bf16.mxu0 0
          %1332 = vmatmul.mubr.bf16.gmra.mxu0 %v1113
          %v1333 = vpop.f32.mrf.mxu0
          %v1334 = vadd.f32 %v1130, %v1333
          %v1335 = vpop.f32.mrf.mxu0
          %v1336 = vpop.f32.mrf.mxu0
          %v1337 = vadd.f32 %v1130, %v1336
          %v1338 = vpop.f32.mrf.mxu0
          %1339 = vdwg.mxu0
          %p1340 = scmp.eq.s32.totalorder %s20, 1
          // Predicated region
          $region53: #{tpu_custom_call.1} parent=51 // pred_check
            %p1341 = pneg %p1340
          $region54: #{tpu_custom_call.1} parent=51 // pred_check_branch
            %1343 = sbr.rel (%p1341) target = $region56
          $region55: #{tpu_custom_call.1} parent=51 // pred_region
            %v1344 = vld [vmem:[#allocation3] sm:$0x1]
            %v1345 = vadd.f32 %v1214, %v1217
            %v1346 = vadd.f32 %v1345, %v1222
            %v1347 = vadd.f32 %v1346, %v1225
            %v1348 = vadd.f32 %v1347, %v1230
            %v1349 = vadd.f32 %v1348, %v1233
            %v1350 = vadd.f32 %v1349, %v1238
            %v1351 = vadd.f32 %v1350, %v1241
            %v1352 = vadd.f32 %v1351, %v1246
            %v1353 = vadd.f32 %v1352, %v1249
            %v1354 = vadd.f32 %v1353, %v1254
            %v1355 = vadd.f32 %v1354, %v1257
            %v1356 = vadd.f32 %v1355, %v1262
            %v1357 = vadd.f32 %v1356, %v1265
            %v1358 = vadd.f32 %v1357, %v1270
            %v1359 = vadd.f32 %v1358, %v1273
            %v1360 = vadd.f32 %v1359, %v1278
            %v1361 = vadd.f32 %v1360, %v1281
            %v1362 = vadd.f32 %v1361, %v1286
            %v1363 = vadd.f32 %v1362, %v1289
            %v1364 = vadd.f32 %v1363, %v1294
            %v1365 = vadd.f32 %v1364, %v1297
            %v1366 = vadd.f32 %v1365, %v1302
            %v1367 = vadd.f32 %v1366, %v1305
            %v1368 = vadd.f32 %v1367, %v1310
            %v1369 = vadd.f32 %v1368, %v1313
            %v1370 = vadd.f32 %v1369, %v1318
            %v1371 = vadd.f32 %v1370, %v1321
            %v1372 = vadd.f32 %v1371, %v1326
            %v1373 = vadd.f32 %v1372, %v1329
            %v1374 = vadd.f32 %v1373, %v1334
            %v1375 = vadd.f32 %v1374, %v1337
            %v1376 = vrot.slane %v1375, 4
            %v1377 = vadd.f32 %v1375, %v1376
            %v1378 = vrot.slane %v1377, 2
            %v1379 = vadd.f32 %v1377, %v1378
            %v1380 = vrot.slane %v1379, 1
            %v1381 = vadd.f32 %v1379, %v1380
            %v1382 = vadd.f32 %v1344, %v1381
            %1383 = vst [vmem:[#allocation3] sm:$0x1] %v1382
            %v1384 = vld [vmem:[#allocation3 + $0x1] sm:$0x1]
            %v1385 = vmul.f32 %v1214, %v1214
            %v1386 = vmul.f32 %v1217, %v1217
            %v1387 = vmul.f32 %v1222, %v1222
            %v1388 = vmul.f32 %v1225, %v1225
            %v1389 = vmul.f32 %v1230, %v1230
            %v1390 = vmul.f32 %v1233, %v1233
            %v1391 = vmul.f32 %v1238, %v1238
            %v1392 = vmul.f32 %v1241, %v1241
            %v1393 = vmul.f32 %v1246, %v1246
            %v1394 = vmul.f32 %v1249, %v1249
            %v1395 = vmul.f32 %v1254, %v1254
            %v1396 = vmul.f32 %v1257, %v1257
            %v1397 = vmul.f32 %v1262, %v1262
            %v1398 = vmul.f32 %v1265, %v1265
            %v1399 = vmul.f32 %v1270, %v1270
            %v1400 = vmul.f32 %v1273, %v1273
            %v1401 = vmul.f32 %v1278, %v1278
            %v1402 = vmul.f32 %v1281, %v1281
            %v1403 = vmul.f32 %v1286, %v1286
            %v1404 = vmul.f32 %v1289, %v1289
            %v1405 = vmul.f32 %v1294, %v1294
            %v1406 = vmul.f32 %v1297, %v1297
            %v1407 = vmul.f32 %v1302, %v1302
            %v1408 = vmul.f32 %v1305, %v1305
            %v1409 = vmul.f32 %v1310, %v1310
            %v1410 = vmul.f32 %v1313, %v1313
            %v1411 = vmul.f32 %v1318, %v1318
            %v1412 = vmul.f32 %v1321, %v1321
            %v1413 = vmul.f32 %v1326, %v1326
            %v1414 = vmul.f32 %v1329, %v1329
            %v1415 = vmul.f32 %v1334, %v1334
            %v1416 = vmul.f32 %v1337, %v1337
            %v1417 = vadd.f32 %v1385, %v1386
            %v1418 = vadd.f32 %v1417, %v1387
            %v1419 = vadd.f32 %v1418, %v1388
            %v1420 = vadd.f32 %v1419, %v1389
            %v1421 = vadd.f32 %v1420, %v1390
            %v1422 = vadd.f32 %v1421, %v1391
            %v1423 = vadd.f32 %v1422, %v1392
            %v1424 = vadd.f32 %v1423, %v1393
            %v1425 = vadd.f32 %v1424, %v1394
            %v1426 = vadd.f32 %v1425, %v1395
            %v1427 = vadd.f32 %v1426, %v1396
            %v1428 = vadd.f32 %v1427, %v1397
            %v1429 = vadd.f32 %v1428, %v1398
            %v1430 = vadd.f32 %v1429, %v1399
            %v1431 = vadd.f32 %v1430, %v1400
            %v1432 = vadd.f32 %v1431, %v1401
            %v1433 = vadd.f32 %v1432, %v1402
            %v1434 = vadd.f32 %v1433, %v1403
            %v1435 = vadd.f32 %v1434, %v1404
            %v1436 = vadd.f32 %v1435, %v1405
            %v1437 = vadd.f32 %v1436, %v1406
            %v1438 = vadd.f32 %v1437, %v1407
            %v1439 = vadd.f32 %v1438, %v1408
            %v1440 = vadd.f32 %v1439, %v1409
            %v1441 = vadd.f32 %v1440, %v1410
            %v1442 = vadd.f32 %v1441, %v1411
            %v1443 = vadd.f32 %v1442, %v1412
            %v1444 = vadd.f32 %v1443, %v1413
            %v1445 = vadd.f32 %v1444, %v1414
            %v1446 = vadd.f32 %v1445, %v1415
            %v1447 = vadd.f32 %v1446, %v1416
            %v1448 = vrot.slane %v1447, 4
            %v1449 = vadd.f32 %v1447, %v1448
            %v1450 = vrot.slane %v1449, 2
            %v1451 = vadd.f32 %v1449, %v1450
            %v1452 = vrot.slane %v1451, 1
            %v1453 = vadd.f32 %v1451, %v1452
            %v1454 = vadd.f32 %v1384, %v1453
            %1455 = vst [vmem:[#allocation3 + $0x1] sm:$0x1] %v1454
            %p1456 = scmp.eq.s32.totalorder %s21, 1
            // Predicated region
            $region57: #{tpu_custom_call.1} parent=55 // pred_check
              %p1457 = pneg %p1456
            $region58: #{tpu_custom_call.1} parent=55 // pred_check_branch
              %1459 = sbr.rel (%p1457) target = $region60
            $region59: #{tpu_custom_call.1} parent=55 // pred_region
              %v1460 = vld [vmem:[%s1 + $0x10] ss:$0 sm:$0xff]
              %v1461 = vld [vmem:[%s1 + $0x11] ss:$0 sm:$0xff]
              %v1462 = vld [vmem:[#allocation3] sm:$0x1]
              %v1463 = vmul.f32 %v1462, 0.001953125
              %v1464 = vld [vmem:[#allocation3 + $0x1] sm:$0x1]
              %v1465 = vmul.f32 %v1464, 0.001953125
              %v1466 = vmul.f32 %v1463, %v1463
              %v1467 = vsub.f32 %v1465, %v1466
              %v1468 = vmax.f32 %v1467, 0.0
              %v1469 = vadd.f32 %v1468, 1e-05
              %v1470 = vrsqrt.pop %v1469
              %v1471 = vmul.f32 %v1460, %v1470
              %1472 = vst [vmem:[#allocation5 + $0x2] sm:$0x1] %v1471
              %v1473 = vmul.f32 %v1463, %v1471
              %v1474 = vsub.f32 %v1461, %v1473
              %1475 = vst [vmem:[#allocation5 + $0x3] sm:$0x1] %v1474
            $region60: #{tpu_custom_call.1} parent=55 // pred_fallthru
              _
          $region56: #{tpu_custom_call.1} parent=51 // pred_fallthru
            _
          %p1476 = scmp.eq.s32.totalorder %s20, 2
          // Predicated region
          $region61: #{tpu_custom_call.1} parent=51 // pred_check
            %p1477 = pneg %p1476
          $region62: #{tpu_custom_call.1} parent=51 // pred_check_branch
            %1479 = sbr.rel (%p1477) target = $region64
          $region63: #{tpu_custom_call.1} parent=51 // pred_region
            %v1480 = vld [vmem:[#allocation5 + $0x2] sm:$0x1]
            %v1481 = vlaneseq
            %v1482 = vshrl.u32 %v1481, 7
            %v1483 = vsub.s32 0, %v1482
            %v1484 = vrot.slane %v1480, %v1483
            %v1485 = vmul.f32 %v1214, %v1484
            %v1486 = vmul.f32 %v1217, %v1484
            %v1487 = vmul.f32 %v1222, %v1484
            %v1488 = vmul.f32 %v1225, %v1484
            %v1489 = vmul.f32 %v1230, %v1484
            %v1490 = vmul.f32 %v1233, %v1484
            %v1491 = vmul.f32 %v1238, %v1484
            %v1492 = vmul.f32 %v1241, %v1484
            %v1493 = vmul.f32 %v1246, %v1484
            %v1494 = vmul.f32 %v1249, %v1484
            %v1495 = vmul.f32 %v1254, %v1484
            %v1496 = vmul.f32 %v1257, %v1484
            %v1497 = vmul.f32 %v1262, %v1484
            %v1498 = vmul.f32 %v1265, %v1484
            %v1499 = vmul.f32 %v1270, %v1484
            %v1500 = vmul.f32 %v1273, %v1484
            %v1501 = vmul.f32 %v1278, %v1484
            %v1502 = vmul.f32 %v1281, %v1484
            %v1503 = vmul.f32 %v1286, %v1484
            %v1504 = vmul.f32 %v1289, %v1484
            %v1505 = vmul.f32 %v1294, %v1484
            %v1506 = vmul.f32 %v1297, %v1484
            %v1507 = vmul.f32 %v1302, %v1484
            %v1508 = vmul.f32 %v1305, %v1484
            %v1509 = vmul.f32 %v1310, %v1484
            %v1510 = vmul.f32 %v1313, %v1484
            %v1511 = vmul.f32 %v1318, %v1484
            %v1512 = vmul.f32 %v1321, %v1484
            %v1513 = vmul.f32 %v1326, %v1484
            %v1514 = vmul.f32 %v1329, %v1484
            %v1515 = vmul.f32 %v1334, %v1484
            %v1516 = vmul.f32 %v1337, %v1484
            %v1517 = vld [vmem:[#allocation5 + $0x3] sm:$0x1]
            %v1518 = vlaneseq
            %v1519 = vshrl.u32 %v1518, 7
            %v1520 = vsub.s32 0, %v1519
            %v1521 = vrot.slane %v1517, %v1520
            %v1522 = vadd.f32 %v1485, %v1521
            %v1523 = vadd.f32 %v1486, %v1521
            %v1524 = vadd.f32 %v1487, %v1521
            %v1525 = vadd.f32 %v1488, %v1521
            %v1526 = vadd.f32 %v1489, %v1521
            %v1527 = vadd.f32 %v1490, %v1521
            %v1528 = vadd.f32 %v1491, %v1521
            %v1529 = vadd.f32 %v1492, %v1521
            %v1530 = vadd.f32 %v1493, %v1521
            %v1531 = vadd.f32 %v1494, %v1521
            %v1532 = vadd.f32 %v1495, %v1521
            %v1533 = vadd.f32 %v1496, %v1521
            %v1534 = vadd.f32 %v1497, %v1521
            %v1535 = vadd.f32 %v1498, %v1521
            %v1536 = vadd.f32 %v1499, %v1521
            %v1537 = vadd.f32 %v1500, %v1521
            %v1538 = vadd.f32 %v1501, %v1521
            %v1539 = vadd.f32 %v1502, %v1521
            %v1540 = vadd.f32 %v1503, %v1521
            %v1541 = vadd.f32 %v1504, %v1521
            %v1542 = vadd.f32 %v1505, %v1521
            %v1543 = vadd.f32 %v1506, %v1521
            %v1544 = vadd.f32 %v1507, %v1521
            %v1545 = vadd.f32 %v1508, %v1521
            %v1546 = vadd.f32 %v1509, %v1521
            %v1547 = vadd.f32 %v1510, %v1521
            %v1548 = vadd.f32 %v1511, %v1521
            %v1549 = vadd.f32 %v1512, %v1521
            %v1550 = vadd.f32 %v1513, %v1521
            %v1551 = vadd.f32 %v1514, %v1521
            %v1552 = vadd.f32 %v1515, %v1521
            %v1553 = vadd.f32 %v1516, %v1521
            %v1554 = vmax.f32 %v1522, 0.0
            %v1555 = vmax.f32 %v1523, 0.0
            %v1556 = vmax.f32 %v1524, 0.0
            %v1557 = vmax.f32 %v1525, 0.0
            %v1558 = vmax.f32 %v1526, 0.0
            %v1559 = vmax.f32 %v1527, 0.0
            %v1560 = vmax.f32 %v1528, 0.0
            %v1561 = vmax.f32 %v1529, 0.0
            %v1562 = vmax.f32 %v1530, 0.0
            %v1563 = vmax.f32 %v1531, 0.0
            %v1564 = vmax.f32 %v1532, 0.0
            %v1565 = vmax.f32 %v1533, 0.0
            %v1566 = vmax.f32 %v1534, 0.0
            %v1567 = vmax.f32 %v1535, 0.0
            %v1568 = vmax.f32 %v1536, 0.0
            %v1569 = vmax.f32 %v1537, 0.0
            %v1570 = vmax.f32 %v1538, 0.0
            %v1571 = vmax.f32 %v1539, 0.0
            %v1572 = vmax.f32 %v1540, 0.0
            %v1573 = vmax.f32 %v1541, 0.0
            %v1574 = vmax.f32 %v1542, 0.0
            %v1575 = vmax.f32 %v1543, 0.0
            %v1576 = vmax.f32 %v1544, 0.0
            %v1577 = vmax.f32 %v1545, 0.0
            %v1578 = vmax.f32 %v1546, 0.0
            %v1579 = vmax.f32 %v1547, 0.0
            %v1580 = vmax.f32 %v1548, 0.0
            %v1581 = vmax.f32 %v1549, 0.0
            %v1582 = vmax.f32 %v1550, 0.0
            %v1583 = vmax.f32 %v1551, 0.0
            %v1584 = vmax.f32 %v1552, 0.0
            %v1585 = vmax.f32 %v1553, 0.0
            %v1586 = vpack.c.bf16 %v1555, %v1554
            %v1587 = vpack.c.bf16 %v1557, %v1556
            %v1588 = vpack.c.bf16 %v1559, %v1558
            %v1589 = vpack.c.bf16 %v1561, %v1560
            %v1590 = vpack.c.bf16 %v1563, %v1562
            %v1591 = vpack.c.bf16 %v1565, %v1564
            %v1592 = vpack.c.bf16 %v1567, %v1566
            %v1593 = vpack.c.bf16 %v1569, %v1568
            %v1594 = vpack.c.bf16 %v1571, %v1570
            %v1595 = vpack.c.bf16 %v1573, %v1572
            %v1596 = vpack.c.bf16 %v1575, %v1574
            %v1597 = vpack.c.bf16 %v1577, %v1576
            %v1598 = vpack.c.bf16 %v1579, %v1578
            %v1599 = vpack.c.bf16 %v1581, %v1580
            %v1600 = vpack.c.bf16 %v1583, %v1582
            %v1601 = vpack.c.bf16 %v1585, %v1584
            %v1602 = vld [vmem:[%s3] sm:$0xf]
            %v1603 = vld [vmem:[%s3 + $0x4] sm:$0xf]
            %v1604 = vld [vmem:[%s3 + $0x8] sm:$0xf]
            %v1605 = vld [vmem:[%s3 + $0xc] sm:$0xf]
            %v1606 = vld [vmem:[%s3 + $0x10] sm:$0xf]
            %v1607 = vld [vmem:[%s3 + $0x14] sm:$0xf]
            %v1608 = vld [vmem:[%s3 + $0x18] sm:$0xf]
            %v1609 = vld [vmem:[%s3 + $0x1c] sm:$0xf]
            %v1610 = vld [vmem:[%s3 + $0x20] sm:$0xf]
            %v1611 = vld [vmem:[%s3 + $0x24] sm:$0xf]
            %v1612 = vld [vmem:[%s3 + $0x28] sm:$0xf]
            %v1613 = vld [vmem:[%s3 + $0x2c] sm:$0xf]
            %v1614 = vld [vmem:[%s3 + $0x30] sm:$0xf]
            %v1615 = vld [vmem:[%s3 + $0x34] sm:$0xf]
            %v1616 = vld [vmem:[%s3 + $0x38] sm:$0xf]
            %v1617 = vld [vmem:[%s3 + $0x3c] sm:$0xf]
            %v1618 = vld [vmem:[%s1 + $0x5] ss:$0 sm:$0xff]
            %v1635 = vunpack.c.l.b16 %v1602
            %v1636 = vunpack.c.l.b16 %v1603
            %v1637 = vunpack.c.l.b16 %v1604
            %v1638 = vunpack.c.l.b16 %v1605
            %v1639 = vunpack.c.l.b16 %v1606
            %v1640 = vunpack.c.l.b16 %v1607
            %v1641 = vunpack.c.l.b16 %v1608
            %v1642 = vunpack.c.l.b16 %v1609
            %v1643 = vunpack.c.l.b16 %v1610
            %v1644 = vunpack.c.l.b16 %v1611
            %v1645 = vunpack.c.l.b16 %v1612
            %v1646 = vunpack.c.l.b16 %v1613
            %v1647 = vunpack.c.l.b16 %v1614
            %v1648 = vunpack.c.l.b16 %v1615
            %v1649 = vunpack.c.l.b16 %v1616
            %v1650 = vunpack.c.l.b16 %v1617
            %v1651 = vpack.c.b16 %v1636, %v1635
            %v1652 = vpack.c.b16 %v1638, %v1637
            %v1653 = vpack.c.b16 %v1640, %v1639
            %v1654 = vpack.c.b16 %v1642, %v1641
            %v1655 = vpack.c.b16 %v1644, %v1643
            %v1656 = vpack.c.b16 %v1646, %v1645
            %v1657 = vpack.c.b16 %v1648, %v1647
            %v1658 = vpack.c.b16 %v1650, %v1649
            %1667 = vmatprep.subr.bf16.mxu0 0
            %1668 = vmatpush1.bf16.msra.mxu0 %v1658
            %1669 = vmatprep.subr.bf16.mxu0 0
            %1670 = vmatpush1.bf16.msra.mxu0 %v1657
            %1671 = vmatprep.subr.bf16.mxu0 0
            %1672 = vmatpush1.bf16.msra.mxu0 %v1656
            %1673 = vmatprep.subr.bf16.mxu0 0
            %1674 = vmatpush1.bf16.msra.mxu0 %v1655
            %1675 = vmatprep.subr.bf16.mxu0 0
            %1676 = vmatpush1.bf16.msra.mxu0 %v1654
            %1677 = vmatprep.subr.bf16.mxu0 0
            %1678 = vmatpush1.bf16.msra.mxu0 %v1653
            %1679 = vmatprep.subr.bf16.mxu0 0
            %1680 = vmatpush1.bf16.msra.mxu0 %v1652
            %1681 = vmatprep.subr.bf16.mxu0 0
            %1682 = vmatpush1.bf16.msra.mxu0 %v1651
            %1683 = vmatprep.subr.bf16.mxu0 0
            %1684 = vmatpush2.bf16.msra.mxu0 0
            %1685 = vmatprep.subr.bf16.mxu0 0
            %1686 = vmatpush2.bf16.msra.mxu0 0
            %1687 = vmatprep.subr.bf16.mxu0 0
            %1688 = vmatpush2.bf16.msra.mxu0 0
            %1689 = vmatprep.subr.bf16.mxu0 0
            %1690 = vmatpush2.bf16.msra.mxu0 0
            %1691 = vmatprep.subr.bf16.mxu0 0
            %1692 = vmatpush2.bf16.msra.mxu0 0
            %1693 = vmatprep.subr.bf16.mxu0 0
            %1694 = vmatpush2.bf16.msra.mxu0 0
            %1695 = vmatprep.subr.bf16.mxu0 0
            %1696 = vmatpush2.bf16.msra.mxu0 0
            %1697 = vmatprep.subr.bf16.mxu0 0
            %1698 = vmatpush2.bf16.msra.mxu0 0
            %1699 = vmatprep.mubr.bf16.mxu0 0
            %1700 = vmatmul.mubr.bf16.gmra.mxu0 %v1586
            %v1701 = vpop.f32.mrf.mxu0
            %v1702 = vadd.f32 %v1618, %v1701
            %v1703 = vpop.f32.mrf.mxu0
            %v1704 = vpop.f32.mrf.mxu0
            %v1705 = vadd.f32 %v1618, %v1704
            %v1706 = vpop.f32.mrf.mxu0
            %1707 = vmatprep.mubr.bf16.mxu0 0
            %1708 = vmatmul.mubr.bf16.gmra.mxu0 %v1587
            %v1709 = vpop.f32.mrf.mxu0
            %v1710 = vadd.f32 %v1618, %v1709
            %v1711 = vpop.f32.mrf.mxu0
            %v1712 = vpop.f32.mrf.mxu0
            %v1713 = vadd.f32 %v1618, %v1712
            %v1714 = vpop.f32.mrf.mxu0
            %1715 = vmatprep.mubr.bf16.mxu0 0
            %1716 = vmatmul.mubr.bf16.gmra.mxu0 %v1588
            %v1717 = vpop.f32.mrf.mxu0
            %v1718 = vadd.f32 %v1618, %v1717
            %v1719 = vpop.f32.mrf.mxu0
            %v1720 = vpop.f32.mrf.mxu0
            %v1721 = vadd.f32 %v1618, %v1720
            %v1722 = vpop.f32.mrf.mxu0
            %1723 = vmatprep.mubr.bf16.mxu0 0
            %1724 = vmatmul.mubr.bf16.gmra.mxu0 %v1589
            %v1725 = vpop.f32.mrf.mxu0
            %v1726 = vadd.f32 %v1618, %v1725
            %v1727 = vpop.f32.mrf.mxu0
            %v1728 = vpop.f32.mrf.mxu0
            %v1729 = vadd.f32 %v1618, %v1728
            %v1730 = vpop.f32.mrf.mxu0
            %1731 = vmatprep.mubr.bf16.mxu0 0
            %1732 = vmatmul.mubr.bf16.gmra.mxu0 %v1590
            %v1733 = vpop.f32.mrf.mxu0
            %v1734 = vadd.f32 %v1618, %v1733
            %v1735 = vpop.f32.mrf.mxu0
            %v1736 = vpop.f32.mrf.mxu0
            %v1737 = vadd.f32 %v1618, %v1736
            %v1738 = vpop.f32.mrf.mxu0
            %1739 = vmatprep.mubr.bf16.mxu0 0
            %1740 = vmatmul.mubr.bf16.gmra.mxu0 %v1591
            %v1741 = vpop.f32.mrf.mxu0
            %v1742 = vadd.f32 %v1618, %v1741
            %v1743 = vpop.f32.mrf.mxu0
            %v1744 = vpop.f32.mrf.mxu0
            %v1745 = vadd.f32 %v1618, %v1744
            %v1746 = vpop.f32.mrf.mxu0
            %1747 = vmatprep.mubr.bf16.mxu0 0
            %1748 = vmatmul.mubr.bf16.gmra.mxu0 %v1592
            %v1749 = vpop.f32.mrf.mxu0
            %v1750 = vadd.f32 %v1618, %v1749
            %v1751 = vpop.f32.mrf.mxu0
            %v1752 = vpop.f32.mrf.mxu0
            %v1753 = vadd.f32 %v1618, %v1752
            %v1754 = vpop.f32.mrf.mxu0
            %1755 = vmatprep.mubr.bf16.mxu0 0
            %1756 = vmatmul.mubr.bf16.gmra.mxu0 %v1593
            %v1757 = vpop.f32.mrf.mxu0
            %v1758 = vadd.f32 %v1618, %v1757
            %v1759 = vpop.f32.mrf.mxu0
            %v1760 = vpop.f32.mrf.mxu0
            %v1761 = vadd.f32 %v1618, %v1760
            %v1762 = vpop.f32.mrf.mxu0
            %1763 = vmatprep.mubr.bf16.mxu0 0
            %1764 = vmatmul.mubr.bf16.gmra.mxu0 %v1594
            %v1765 = vpop.f32.mrf.mxu0
            %v1766 = vadd.f32 %v1618, %v1765
            %v1767 = vpop.f32.mrf.mxu0
            %v1768 = vpop.f32.mrf.mxu0
            %v1769 = vadd.f32 %v1618, %v1768
            %v1770 = vpop.f32.mrf.mxu0
            %1771 = vmatprep.mubr.bf16.mxu0 0
            %1772 = vmatmul.mubr.bf16.gmra.mxu0 %v1595
            %v1773 = vpop.f32.mrf.mxu0
            %v1774 = vadd.f32 %v1618, %v1773
            %v1775 = vpop.f32.mrf.mxu0
            %v1776 = vpop.f32.mrf.mxu0
            %v1777 = vadd.f32 %v1618, %v1776
            %v1778 = vpop.f32.mrf.mxu0
            %1779 = vmatprep.mubr.bf16.mxu0 0
            %1780 = vmatmul.mubr.bf16.gmra.mxu0 %v1596
            %v1781 = vpop.f32.mrf.mxu0
            %v1782 = vadd.f32 %v1618, %v1781
            %v1783 = vpop.f32.mrf.mxu0
            %v1784 = vpop.f32.mrf.mxu0
            %v1785 = vadd.f32 %v1618, %v1784
            %v1786 = vpop.f32.mrf.mxu0
            %1787 = vmatprep.mubr.bf16.mxu0 0
            %1788 = vmatmul.mubr.bf16.gmra.mxu0 %v1597
            %v1789 = vpop.f32.mrf.mxu0
            %v1790 = vadd.f32 %v1618, %v1789
            %v1791 = vpop.f32.mrf.mxu0
            %v1792 = vpop.f32.mrf.mxu0
            %v1793 = vadd.f32 %v1618, %v1792
            %v1794 = vpop.f32.mrf.mxu0
            %1795 = vmatprep.mubr.bf16.mxu0 0
            %1796 = vmatmul.mubr.bf16.gmra.mxu0 %v1598
            %v1797 = vpop.f32.mrf.mxu0
            %v1798 = vadd.f32 %v1618, %v1797
            %v1799 = vpop.f32.mrf.mxu0
            %v1800 = vpop.f32.mrf.mxu0
            %v1801 = vadd.f32 %v1618, %v1800
            %v1802 = vpop.f32.mrf.mxu0
            %1803 = vmatprep.mubr.bf16.mxu0 0
            %1804 = vmatmul.mubr.bf16.gmra.mxu0 %v1599
            %v1805 = vpop.f32.mrf.mxu0
            %v1806 = vadd.f32 %v1618, %v1805
            %v1807 = vpop.f32.mrf.mxu0
            %v1808 = vpop.f32.mrf.mxu0
            %v1809 = vadd.f32 %v1618, %v1808
            %v1810 = vpop.f32.mrf.mxu0
            %1811 = vmatprep.mubr.bf16.mxu0 0
            %1812 = vmatmul.mubr.bf16.gmra.mxu0 %v1600
            %v1813 = vpop.f32.mrf.mxu0
            %v1814 = vadd.f32 %v1618, %v1813
            %v1815 = vpop.f32.mrf.mxu0
            %v1816 = vpop.f32.mrf.mxu0
            %v1817 = vadd.f32 %v1618, %v1816
            %v1818 = vpop.f32.mrf.mxu0
            %1819 = vmatprep.mubr.bf16.mxu0 0
            %1820 = vmatmul.mubr.bf16.gmra.mxu0 %v1601
            %v1821 = vpop.f32.mrf.mxu0
            %v1822 = vadd.f32 %v1618, %v1821
            %v1823 = vpop.f32.mrf.mxu0
            %v1824 = vpop.f32.mrf.mxu0
            %v1825 = vadd.f32 %v1618, %v1824
            %v1826 = vpop.f32.mrf.mxu0
            %1827 = vdwg.mxu0
            %v1828 = vld [vmem:[#allocation4] sm:$0x1]
            %v1829 = vadd.f32 %v1702, %v1705
            %v1830 = vadd.f32 %v1829, %v1710
            %v1831 = vadd.f32 %v1830, %v1713
            %v1832 = vadd.f32 %v1831, %v1718
            %v1833 = vadd.f32 %v1832, %v1721
            %v1834 = vadd.f32 %v1833, %v1726
            %v1835 = vadd.f32 %v1834, %v1729
            %v1836 = vadd.f32 %v1835, %v1734
            %v1837 = vadd.f32 %v1836, %v1737
            %v1838 = vadd.f32 %v1837, %v1742
            %v1839 = vadd.f32 %v1838, %v1745
            %v1840 = vadd.f32 %v1839, %v1750
            %v1841 = vadd.f32 %v1840, %v1753
            %v1842 = vadd.f32 %v1841, %v1758
            %v1843 = vadd.f32 %v1842, %v1761
            %v1844 = vadd.f32 %v1843, %v1766
            %v1845 = vadd.f32 %v1844, %v1769
            %v1846 = vadd.f32 %v1845, %v1774
            %v1847 = vadd.f32 %v1846, %v1777
            %v1848 = vadd.f32 %v1847, %v1782
            %v1849 = vadd.f32 %v1848, %v1785
            %v1850 = vadd.f32 %v1849, %v1790
            %v1851 = vadd.f32 %v1850, %v1793
            %v1852 = vadd.f32 %v1851, %v1798
            %v1853 = vadd.f32 %v1852, %v1801
            %v1854 = vadd.f32 %v1853, %v1806
            %v1855 = vadd.f32 %v1854, %v1809
            %v1856 = vadd.f32 %v1855, %v1814
            %v1857 = vadd.f32 %v1856, %v1817
            %v1858 = vadd.f32 %v1857, %v1822
            %v1859 = vadd.f32 %v1858, %v1825
            %v1860 = vrot.slane %v1859, 4
            %v1861 = vadd.f32 %v1859, %v1860
            %v1862 = vrot.slane %v1861, 2
            %v1863 = vadd.f32 %v1861, %v1862
            %v1864 = vrot.slane %v1863, 1
            %v1865 = vadd.f32 %v1863, %v1864
            %v1866 = vadd.f32 %v1828, %v1865
            %1867 = vst [vmem:[#allocation4] sm:$0x1] %v1866
            %v1868 = vld [vmem:[#allocation4 + $0x1] sm:$0x1]
            %v1869 = vmul.f32 %v1702, %v1702
            %v1870 = vmul.f32 %v1705, %v1705
            %v1871 = vmul.f32 %v1710, %v1710
            %v1872 = vmul.f32 %v1713, %v1713
            %v1873 = vmul.f32 %v1718, %v1718
            %v1874 = vmul.f32 %v1721, %v1721
            %v1875 = vmul.f32 %v1726, %v1726
            %v1876 = vmul.f32 %v1729, %v1729
            %v1877 = vmul.f32 %v1734, %v1734
            %v1878 = vmul.f32 %v1737, %v1737
            %v1879 = vmul.f32 %v1742, %v1742
            %v1880 = vmul.f32 %v1745, %v1745
            %v1881 = vmul.f32 %v1750, %v1750
            %v1882 = vmul.f32 %v1753, %v1753
            %v1883 = vmul.f32 %v1758, %v1758
            %v1884 = vmul.f32 %v1761, %v1761
            %v1885 = vmul.f32 %v1766, %v1766
            %v1886 = vmul.f32 %v1769, %v1769
            %v1887 = vmul.f32 %v1774, %v1774
            %v1888 = vmul.f32 %v1777, %v1777
            %v1889 = vmul.f32 %v1782, %v1782
            %v1890 = vmul.f32 %v1785, %v1785
            %v1891 = vmul.f32 %v1790, %v1790
            %v1892 = vmul.f32 %v1793, %v1793
            %v1893 = vmul.f32 %v1798, %v1798
            %v1894 = vmul.f32 %v1801, %v1801
            %v1895 = vmul.f32 %v1806, %v1806
            %v1896 = vmul.f32 %v1809, %v1809
            %v1897 = vmul.f32 %v1814, %v1814
            %v1898 = vmul.f32 %v1817, %v1817
            %v1899 = vmul.f32 %v1822, %v1822
            %v1900 = vmul.f32 %v1825, %v1825
            %v1901 = vadd.f32 %v1869, %v1870
            %v1902 = vadd.f32 %v1901, %v1871
            %v1903 = vadd.f32 %v1902, %v1872
            %v1904 = vadd.f32 %v1903, %v1873
            %v1905 = vadd.f32 %v1904, %v1874
            %v1906 = vadd.f32 %v1905, %v1875
            %v1907 = vadd.f32 %v1906, %v1876
            %v1908 = vadd.f32 %v1907, %v1877
            %v1909 = vadd.f32 %v1908, %v1878
            %v1910 = vadd.f32 %v1909, %v1879
            %v1911 = vadd.f32 %v1910, %v1880
            %v1912 = vadd.f32 %v1911, %v1881
            %v1913 = vadd.f32 %v1912, %v1882
            %v1914 = vadd.f32 %v1913, %v1883
            %v1915 = vadd.f32 %v1914, %v1884
            %v1916 = vadd.f32 %v1915, %v1885
            %v1917 = vadd.f32 %v1916, %v1886
            %v1918 = vadd.f32 %v1917, %v1887
            %v1919 = vadd.f32 %v1918, %v1888
            %v1920 = vadd.f32 %v1919, %v1889
            %v1921 = vadd.f32 %v1920, %v1890
            %v1922 = vadd.f32 %v1921, %v1891
            %v1923 = vadd.f32 %v1922, %v1892
            %v1924 = vadd.f32 %v1923, %v1893
            %v1925 = vadd.f32 %v1924, %v1894
            %v1926 = vadd.f32 %v1925, %v1895
            %v1927 = vadd.f32 %v1926, %v1896
            %v1928 = vadd.f32 %v1927, %v1897
            %v1929 = vadd.f32 %v1928, %v1898
            %v1930 = vadd.f32 %v1929, %v1899
            %v1931 = vadd.f32 %v1930, %v1900
            %v1932 = vrot.slane %v1931, 4
            %v1933 = vadd.f32 %v1931, %v1932
            %v1934 = vrot.slane %v1933, 2
            %v1935 = vadd.f32 %v1933, %v1934
            %v1936 = vrot.slane %v1935, 1
            %v1937 = vadd.f32 %v1935, %v1936
            %v1938 = vadd.f32 %v1868, %v1937
            %1939 = vst [vmem:[#allocation4 + $0x1] sm:$0x1] %v1938
            %p1940 = scmp.eq.s32.totalorder %s21, 1
            // Predicated region
            $region65: #{tpu_custom_call.1} parent=63 // pred_check
              %p1941 = pneg %p1940
            $region66: #{tpu_custom_call.1} parent=63 // pred_check_branch
              %1943 = sbr.rel (%p1941) target = $region68
            $region67: #{tpu_custom_call.1} parent=63 // pred_region
              %v1944 = vld [vmem:[%s1 + $0x12] ss:$0 sm:$0xff]
              %v1945 = vld [vmem:[%s1 + $0x13] ss:$0 sm:$0xff]
              %v1946 = vld [vmem:[#allocation4] sm:$0x1]
              %v1947 = vmul.f32 %v1946, 0.001953125
              %v1948 = vld [vmem:[#allocation4 + $0x1] sm:$0x1]
              %v1949 = vmul.f32 %v1948, 0.001953125
              %v1950 = vmul.f32 %v1947, %v1947
              %v1951 = vsub.f32 %v1949, %v1950
              %v1952 = vmax.f32 %v1951, 0.0
              %v1953 = vadd.f32 %v1952, 1e-05
              %v1954 = vrsqrt.pop %v1953
              %v1955 = vmul.f32 %v1944, %v1954
              %1956 = vst [vmem:[#allocation5 + $0x4] sm:$0x1] %v1955
              %v1957 = vmul.f32 %v1947, %v1955
              %v1958 = vsub.f32 %v1945, %v1957
              %1959 = vst [vmem:[#allocation5 + $0x5] sm:$0x1] %v1958
            $region68: #{tpu_custom_call.1} parent=63 // pred_fallthru
              _
          $region64: #{tpu_custom_call.1} parent=51 // pred_fallthru
            _
        $region52: #{tpu_custom_call.1} parent=35 // pred_fallthru
          _
        // Predicated region
        $region69: #{tpu_custom_call.1} parent=35 // pred_check
          %p1960 = pneg %p130
        $region70: #{tpu_custom_call.1} parent=35 // pred_check_branch
          %1962 = sbr.rel (%p1960) target = $region72
        $region71: #{tpu_custom_call.1} parent=35 // pred_region
          %s1964 = ssub.s32 128, 128
          %1965 = vsyncadd [#allocation6], %s1964
          %s1967 = sshll.u32 [#allocation5], 4
          %s1968 = int_to_ptr.vmem [resolvable:$true] %s1967
          %1970 = dma.vmem_to_hbm [thread:$0]  %s1968, 128, %s4, [#allocation6]
        $region72: #{tpu_custom_call.1} parent=35 // pred_fallthru
          _
        // Predicated region
        $region73: #{tpu_custom_call.1} parent=35 // pred_check
          %p1971 = pneg %p130
        $region74: #{tpu_custom_call.1} parent=35 // pred_check_branch
          %1973 = sbr.rel (%p1971) target = $region76
        $region75: #{tpu_custom_call.1} parent=35 // pred_region
          %1974 = dma.done [#allocation6], 128
        $region76: #{tpu_custom_call.1} parent=35 // pred_fallthru
          _
      $region36: #{tpu_custom_call.1} parent=5 // pred_fallthru
        _
      %p1975 = scmp.le.s32.totalorder 2, %s11
      // Predicated region
      $region77: #{tpu_custom_call.1} parent=5 // pred_check
        %p1976 = pneg %p1975
      $region78: #{tpu_custom_call.1} parent=5 // pred_check_branch
        %1978 = sbr.rel (%p1976) target = $region80
      $region79: #{tpu_custom_call.1} parent=5 // pred_region
        %s1979 = ssub.s32 %s11, 2
      $region80: #{tpu_custom_call.1} parent=5 // pred_fallthru
        _
    $region6: #{tpu_custom_call.1} parent=1 // loop_footer
      %s15 = sadd.s32 1, %s11
    $region7: #{tpu_custom_call.1} parent=1 // loop_footer_branch
      %10 = sbr.rel target = $region3
    $region8: #{tpu_custom_call.1} parent=1 // loop_exit
      _
    %1980 = vsyncpa [#allocation6], 1
    %s1981 = scalar_lea.sflag [#allocation6], 1
    %1982 = vsyncpa %s1981, 1

</llo_original>
